<compile_context>
chip_gen: v5e
topology: v5e:2x2
jax: 0.10.0
libtpu: 0.0.40
codegen_flags: <defaults>
</compile_context>

<pallas_src>
import functools
import math

import jax
import jax.numpy as jnp
from jax.experimental import pallas as pl
from jax.experimental.pallas import tpu as pltpu

KSIZE = 7
PAD = (KSIZE - 1) // 2


def _spatial_gate_kernel(x_ref, w_ref, bn_ref, o_ref, pad_ref, gflat_ref, *, H, W):
    """NB batch images per grid step.

    x_ref, o_ref : (NB, C, H*W) VMEM (lane-dense)
    w_ref        : (2*K*K,) f32 SMEM  flattened conv weight (OIHW order)
    bn_ref       : (2,)     f32 SMEM  folded BN (scale, shift)
    pad_ref      : (2, H+2P, WPAD) f32 VMEM scratch (zero-padded compressed map)
    gflat_ref    : (1, H*W) f32 VMEM scratch (flattened gate row)
    """
    K, P = KSIZE, PAD
    NB, C, HW = x_ref.shape
    Hp = pad_ref.shape[1]
    WPAD = pad_ref.shape[2]

    # Hoist all SMEM scalar reads out of the loops.
    wts = [w_ref[i] for i in range(2 * K * K)]
    bn_scale = bn_ref[0]
    bn_shift = bn_ref[1]

    # Chunk sizes chosen to bound vreg pressure:
    #   CCH : channel-reduce chunk (<= ~16 vregs of f32 live per chunk)
    #   HC  : conv output-row chunk (7 partial accumulators <= ~14 vregs)
    CCH = max(1, min(8, 16384 // HW))
    HC = max(1, min(H, 2048 // WPAD))

    # Zero the padded compressed-map scratch once per grid step: the (H, W)
    # interior is fully overwritten for every image below, so only the halo
    # needs to be (and stays) zero.  Tiny buffer -> a handful of vregs.
    pad_ref[...] = jnp.zeros((2, Hp, WPAD), jnp.float32)

    for b in range(NB):
        # --- ChannelPool: fused single-pass chunked max + mean over channels ---
        # Max runs in the input dtype (bf16-native on v6e/v7x); mean accumulates
        # in f32.  Each big-tile element is loaded exactly once for the reduce.
        run_max = None
        run_sum = None
        for c0 in range(0, C, CCH):
            cc = min(CCH, C - c0)
            chunk = x_ref[b, c0:c0 + cc, :]                                # (cc, HW)
            cmax = jnp.max(chunk, axis=0, keepdims=True)                   # x dtype
            csum = jnp.sum(chunk.astype(jnp.float32), axis=0, keepdims=True)
            run_max = cmax if run_max is None else jnp.maximum(run_max, cmax)
            run_sum = csum if run_sum is None else run_sum + csum
        x_max = run_max.astype(jnp.float32)                                # (1, HW)
        x_mean = run_sum * (1.0 / C)                                       # (1, HW)

        # --- scatter rows into the zero-padded 2-channel map ---
        # TODO(synk): for small W, lane-pack several image rows per 128-lane
        #             segment (each with its own P-lane halo) to remove these
        #             masked row stores and raise conv lane utilization.
        for h in range(H):
            lo = h * W
            pad_ref[0, P + h:P + h + 1, P:P + W] = x_max[:, lo:lo + W]
            pad_ref[1, P + h:P + h + 1, P:P + W] = x_mean[:, lo:lo + W]

        # --- 7x7 "same" conv (2 -> 1 channel, no bias), BN, sigmoid ---
        #   * 7 independent per-kw partial accumulators -> no serial add chain.
        #   * kh shift = sublane-offset ref load (cheap vld).
        #   * kw shift = ONE lane roll per kw applied to the finished partial
        #     (6 XLU rolls per row-chunk instead of 84 per-tap rolls).
        for h0 in range(0, H, HC):
            hc = min(HC, H - h0)
            partials = [None] * K
            for c in range(2):
                for kh in range(K):
                    row = pad_ref[c, h0 + kh:h0 + kh + hc, :]              # (hc, WPAD)
                    for kw in range(K):
                        t = wts[c * K * K + kh * K + kw] * row
                        partials[kw] = t if partials[kw] is None else partials[kw] + t
            conv = partials[0]
            for kw in range(1, K):
                # Left-rotate by kw: output col w reads padded col w+kw; never
                # wraps for w < W because W + 2*P <= WPAD and halo cols are 0.
                conv = conv + pltpu.roll(partials[kw], WPAD - kw, axis=1)
            gate = jax.nn.sigmoid(conv * bn_scale + bn_shift)              # (hc, WPAD)
            for r in range(hc):
                h = h0 + r
                gflat_ref[0:1, h * W:(h + 1) * W] = gate[r:r + 1, 0:W]

        # --- apply gate on the lane-dense view; gate cast once to the input
        #     dtype so the dominant multiply/store pass is bf16-native on
        #     v6e/v7x for bf16 inputs (f32 inputs are bit-identical to before).
        g = gflat_ref[...].astype(x_ref.dtype)                             # (1, HW)
        o_ref[b] = (x_ref[b] * g).astype(o_ref.dtype)


def spatial_gate(x, conv_w, bn_scale_shift):
    """x: (N,C,H,W); conv_w: (1,2,K,K); bn_scale_shift: (2,) = (scale, shift)."""
    N, C, H, W = x.shape
    HW = H * W
    Hp = H + 2 * PAD
    WPAD = ((W + 2 * PAD + 127) // 128) * 128        # lane-aligned padded row width

    x_flat = x.reshape(N, C, HW)                     # lane-dense view (free in XLA)
    w_flat = conv_w.reshape(-1).astype(jnp.float32)
    bn = bn_scale_shift.astype(jnp.float32)

    itemsize = jnp.dtype(x.dtype).itemsize
    per_image_bytes = C * HW * itemsize

    # Batch-block several images per grid step (amortize ~0.35us/step for small
    # images), but keep >= 2 grid steps when N >= 2 so the "parallel" batch
    # axis can still shard across both v7x TensorCores.
    NB = 1
    for d in range(1, N + 1):
        if N % d:
            continue
        if d > 8 or d * per_image_bytes > (2 << 20):
            break
        if (N // d) >= min(N, 2):
            NB = d
    GN = N // NB

    kernel = functools.partial(_spatial_gate_kernel, H=H, W=W)

    # VMEM budget: double-buffered in/out tiles + per-step scratch + headroom,
    # capped v7x-safe (64 MiB physical / TC; leave room for the runtime).
    tile_bytes = NB * per_image_bytes
    scratch_bytes = (2 * Hp * WPAD + HW) * 4
    vmem_limit = 4 * tile_bytes + 2 * scratch_bytes + (4 << 20)
    vmem_limit = int(min(max(vmem_limit, 16 << 20), 55 << 20))
    # TODO(synk): if a single per-image tile approaches the cap (e.g. C=1024 at
    #             56x56 f32), add an H-row grid axis with a 3-row halo on the
    #             compressed map instead of raising the VMEM cap.

    out_flat = pl.pallas_call(
        kernel,
        out_shape=jax.ShapeDtypeStruct((N, C, HW), x.dtype),
        grid=(GN,),
        in_specs=[
            pl.BlockSpec((NB, C, HW), lambda n: (n, 0, 0)),              # x tile
            pl.BlockSpec((2 * KSIZE * KSIZE,), lambda n: (0,),
                         memory_space=pltpu.MemorySpace.SMEM),           # conv weights
            pl.BlockSpec((2,), lambda n: (0,),
                         memory_space=pltpu.MemorySpace.SMEM),           # bn scale/shift
        ],
        out_specs=pl.BlockSpec((NB, C, HW), lambda n: (n, 0, 0)),
        scratch_shapes=[
            pltpu.VMEM((2, Hp, WPAD), jnp.float32),    # padded compressed map
            pltpu.VMEM((1, HW), jnp.float32),          # flattened gate row
        ],
        compiler_params=pltpu.CompilerParams(
            dimension_semantics=("parallel",),         # megacore-shard batch blocks
            vmem_limit_bytes=vmem_limit,
        ),
    )(x_flat, w_flat, bn)
    return out_flat.reshape(N, C, H, W)


def spatial_gate_ref(x, conv_w, bn_scale_shift):
    """Pure-JAX reference (same math as the PyTorch module, eval-mode BN)."""
    x_max = jnp.max(x, axis=1, keepdims=True)
    x_mean = jnp.mean(x, axis=1, keepdims=True)
    comp = jnp.concatenate([x_max, x_mean], axis=1)               # (N,2,H,W)
    conv = jax.lax.conv_general_dilated(
        comp, conv_w, window_strides=(1, 1),
        padding=[(PAD, PAD), (PAD, PAD)],
        dimension_numbers=("NCHW", "OIHW", "NCHW"))               # (N,1,H,W)
    gate = jax.nn.sigmoid(conv * bn_scale_shift[0] + bn_scale_shift[1])
    return x * gate


if __name__ == "__main__":
    key = jax.random.PRNGKey(0)
    kx, kw = jax.random.split(key)

    # input: (N=2, C=4, H=16, W=16), NCHW like the PyTorch module
    x = jax.random.normal(kx, (2, 4, 16, 16), dtype=jnp.float32)

    # Conv2d(2, 1, 7, bias=False) weight, PyTorch-like uniform fan-in init
    fan_in = 2 * KSIZE * KSIZE
    bound = 1.0 / math.sqrt(fan_in)
    conv_w = jax.random.uniform(kw, (1, 2, KSIZE, KSIZE), jnp.float32,
                                minval=-bound, maxval=bound)

    # BatchNorm2d(1) default params, eval mode, folded to (scale, shift)
    eps = 1e-5
    gamma = jnp.ones((1,), jnp.float32)
    beta = jnp.zeros((1,), jnp.float32)
    r_mean = jnp.zeros((1,), jnp.float32)
    r_var = jnp.ones((1,), jnp.float32)
    bn_scale = gamma / jnp.sqrt(r_var + eps)
    bn_shift = beta - r_mean * bn_scale
    bn_scale_shift = jnp.concatenate([bn_scale, bn_shift]).astype(jnp.float32)

    # f32 path
    out = jax.block_until_ready(spatial_gate(x, conv_w, bn_scale_shift))
    ref = jax.block_until_ready(spatial_gate_ref(x, conv_w, bn_scale_shift))
    assert out.shape == x.shape and out.dtype == x.dtype
    assert jnp.allclose(out, ref, rtol=1e-4, atol=1e-4), "f32 mismatch vs reference"

    # bf16 path (big-tile reduce/multiply run in bf16; conv/BN/sigmoid stay f32)
    x_bf = x.astype(jnp.bfloat16)
    out_bf = jax.block_until_ready(spatial_gate(x_bf, conv_w, bn_scale_shift))
    ref_bf = spatial_gate_ref(x_bf.astype(jnp.float32), conv_w, bn_scale_shift)
    assert out_bf.shape == x.shape and out_bf.dtype == jnp.bfloat16
    assert jnp.allclose(out_bf.astype(jnp.float32), ref_bf, rtol=3e-2, atol=3e-2), \
        "bf16 mismatch vs reference"

    print("KERNEL_OK")
</pallas_src>

<mosaic_0001>
module attributes {stable_mosaic.version = 11 : i64} {
  func.func @_spatial_gate_kernel(%arg0: i32, %arg1: memref<1x4x256xf32, #tpu.memory_space<vmem>>, %arg2: memref<98xf32, #tpu.memory_space<smem>>, %arg3: memref<2xf32, #tpu.memory_space<smem>>, %arg4: memref<1x4x256xf32, #tpu.memory_space<vmem>>, %arg5: memref<2x22x128xf32, #tpu.memory_space<vmem>>, %arg6: memref<1x256xf32, #tpu.memory_space<vmem>>) attributes {dimension_semantics = [#tpu.dimension_semantics<parallel>], iteration_bounds = array<i64: 2>, scalar_prefetch = 0 : i64, scratch_operands = 2 : i64, tpu.core_type = #tpu.core_type<tc>, window_params = [{transform_indices = @transform_0, window_bounds = array<i64: 1, 4, 256>}, {transform_indices = @transform_1, window_bounds = array<i64: 98>}, {transform_indices = @transform_2, window_bounds = array<i64: 2>}, {transform_indices = @transform_3, window_bounds = array<i64: 1, 4, 256>}]} {
    %c0 = arith.constant 0 : index
    %0 = memref.load %arg2[%c0] : memref<98xf32, #tpu.memory_space<smem>>
    %c1 = arith.constant 1 : index
    %1 = memref.load %arg2[%c1] : memref<98xf32, #tpu.memory_space<smem>>
    %c2 = arith.constant 2 : index
    %2 = memref.load %arg2[%c2] : memref<98xf32, #tpu.memory_space<smem>>
    %c3 = arith.constant 3 : index
    %3 = memref.load %arg2[%c3] : memref<98xf32, #tpu.memory_space<smem>>
    %c4 = arith.constant 4 : index
    %4 = memref.load %arg2[%c4] : memref<98xf32, #tpu.memory_space<smem>>
    %c5 = arith.constant 5 : index
    %5 = memref.load %arg2[%c5] : memref<98xf32, #tpu.memory_space<smem>>
    %c6 = arith.constant 6 : index
    %6 = memref.load %arg2[%c6] : memref<98xf32, #tpu.memory_space<smem>>
    %c7 = arith.constant 7 : index
    %7 = memref.load %arg2[%c7] : memref<98xf32, #tpu.memory_space<smem>>
    %c8 = arith.constant 8 : index
    %8 = memref.load %arg2[%c8] : memref<98xf32, #tpu.memory_space<smem>>
    %c9 = arith.constant 9 : index
    %9 = memref.load %arg2[%c9] : memref<98xf32, #tpu.memory_space<smem>>
    %c10 = arith.constant 10 : index
    %10 = memref.load %arg2[%c10] : memref<98xf32, #tpu.memory_space<smem>>
    %c11 = arith.constant 11 : index
    %11 = memref.load %arg2[%c11] : memref<98xf32, #tpu.memory_space<smem>>
    %c12 = arith.constant 12 : index
    %12 = memref.load %arg2[%c12] : memref<98xf32, #tpu.memory_space<smem>>
    %c13 = arith.constant 13 : index
    %13 = memref.load %arg2[%c13] : memref<98xf32, #tpu.memory_space<smem>>
    %c14 = arith.constant 14 : index
    %14 = memref.load %arg2[%c14] : memref<98xf32, #tpu.memory_space<smem>>
    %c15 = arith.constant 15 : index
    %15 = memref.load %arg2[%c15] : memref<98xf32, #tpu.memory_space<smem>>
    %c16 = arith.constant 16 : index
    %16 = memref.load %arg2[%c16] : memref<98xf32, #tpu.memory_space<smem>>
    %c17 = arith.constant 17 : index
    %17 = memref.load %arg2[%c17] : memref<98xf32, #tpu.memory_space<smem>>
    %c18 = arith.constant 18 : index
    %18 = memref.load %arg2[%c18] : memref<98xf32, #tpu.memory_space<smem>>
    %c19 = arith.constant 19 : index
    %19 = memref.load %arg2[%c19] : memref<98xf32, #tpu.memory_space<smem>>
    %c20 = arith.constant 20 : index
    %20 = memref.load %arg2[%c20] : memref<98xf32, #tpu.memory_space<smem>>
    %c21 = arith.constant 21 : index
    %21 = memref.load %arg2[%c21] : memref<98xf32, #tpu.memory_space<smem>>
    %c22 = arith.constant 22 : index
    %22 = memref.load %arg2[%c22] : memref<98xf32, #tpu.memory_space<smem>>
    %c23 = arith.constant 23 : index
    %23 = memref.load %arg2[%c23] : memref<98xf32, #tpu.memory_space<smem>>
    %c24 = arith.constant 24 : index
    %24 = memref.load %arg2[%c24] : memref<98xf32, #tpu.memory_space<smem>>
    %c25 = arith.constant 25 : index
    %25 = memref.load %arg2[%c25] : memref<98xf32, #tpu.memory_space<smem>>
    %c26 = arith.constant 26 : index
    %26 = memref.load %arg2[%c26] : memref<98xf32, #tpu.memory_space<smem>>
    %c27 = arith.constant 27 : index
    %27 = memref.load %arg2[%c27] : memref<98xf32, #tpu.memory_space<smem>>
    %c28 = arith.constant 28 : index
    %28 = memref.load %arg2[%c28] : memref<98xf32, #tpu.memory_space<smem>>
    %c29 = arith.constant 29 : index
    %29 = memref.load %arg2[%c29] : memref<98xf32, #tpu.memory_space<smem>>
    %c30 = arith.constant 30 : index
    %30 = memref.load %arg2[%c30] : memref<98xf32, #tpu.memory_space<smem>>
    %c31 = arith.constant 31 : index
    %31 = memref.load %arg2[%c31] : memref<98xf32, #tpu.memory_space<smem>>
    %c32 = arith.constant 32 : index
    %32 = memref.load %arg2[%c32] : memref<98xf32, #tpu.memory_space<smem>>
    %c33 = arith.constant 33 : index
    %33 = memref.load %arg2[%c33] : memref<98xf32, #tpu.memory_space<smem>>
    %c34 = arith.constant 34 : index
    %34 = memref.load %arg2[%c34] : memref<98xf32, #tpu.memory_space<smem>>
    %c35 = arith.constant 35 : index
    %35 = memref.load %arg2[%c35] : memref<98xf32, #tpu.memory_space<smem>>
    %c36 = arith.constant 36 : index
    %36 = memref.load %arg2[%c36] : memref<98xf32, #tpu.memory_space<smem>>
    %c37 = arith.constant 37 : index
    %37 = memref.load %arg2[%c37] : memref<98xf32, #tpu.memory_space<smem>>
    %c38 = arith.constant 38 : index
    %38 = memref.load %arg2[%c38] : memref<98xf32, #tpu.memory_space<smem>>
    %c39 = arith.constant 39 : index
    %39 = memref.load %arg2[%c39] : memref<98xf32, #tpu.memory_space<smem>>
    %c40 = arith.constant 40 : index
    %40 = memref.load %arg2[%c40] : memref<98xf32, #tpu.memory_space<smem>>
    %c41 = arith.constant 41 : index
    %41 = memref.load %arg2[%c41] : memref<98xf32, #tpu.memory_space<smem>>
    %c42 = arith.constant 42 : index
    %42 = memref.load %arg2[%c42] : memref<98xf32, #tpu.memory_space<smem>>
    %c43 = arith.constant 43 : index
    %43 = memref.load %arg2[%c43] : memref<98xf32, #tpu.memory_space<smem>>
    %c44 = arith.constant 44 : index
    %44 = memref.load %arg2[%c44] : memref<98xf32, #tpu.memory_space<smem>>
    %c45 = arith.constant 45 : index
    %45 = memref.load %arg2[%c45] : memref<98xf32, #tpu.memory_space<smem>>
    %c46 = arith.constant 46 : index
    %46 = memref.load %arg2[%c46] : memref<98xf32, #tpu.memory_space<smem>>
    %c47 = arith.constant 47 : index
    %47 = memref.load %arg2[%c47] : memref<98xf32, #tpu.memory_space<smem>>
    %c48 = arith.constant 48 : index
    %48 = memref.load %arg2[%c48] : memref<98xf32, #tpu.memory_space<smem>>
    %c49 = arith.constant 49 : index
    %49 = memref.load %arg2[%c49] : memref<98xf32, #tpu.memory_space<smem>>
    %c50 = arith.constant 50 : index
    %50 = memref.load %arg2[%c50] : memref<98xf32, #tpu.memory_space<smem>>
    %c51 = arith.constant 51 : index
    %51 = memref.load %arg2[%c51] : memref<98xf32, #tpu.memory_space<smem>>
    %c52 = arith.constant 52 : index
    %52 = memref.load %arg2[%c52] : memref<98xf32, #tpu.memory_space<smem>>
    %c53 = arith.constant 53 : index
    %53 = memref.load %arg2[%c53] : memref<98xf32, #tpu.memory_space<smem>>
    %c54 = arith.constant 54 : index
    %54 = memref.load %arg2[%c54] : memref<98xf32, #tpu.memory_space<smem>>
    %c55 = arith.constant 55 : index
    %55 = memref.load %arg2[%c55] : memref<98xf32, #tpu.memory_space<smem>>
    %c56 = arith.constant 56 : index
    %56 = memref.load %arg2[%c56] : memref<98xf32, #tpu.memory_space<smem>>
    %c57 = arith.constant 57 : index
    %57 = memref.load %arg2[%c57] : memref<98xf32, #tpu.memory_space<smem>>
    %c58 = arith.constant 58 : index
    %58 = memref.load %arg2[%c58] : memref<98xf32, #tpu.memory_space<smem>>
    %c59 = arith.constant 59 : index
    %59 = memref.load %arg2[%c59] : memref<98xf32, #tpu.memory_space<smem>>
    %c60 = arith.constant 60 : index
    %60 = memref.load %arg2[%c60] : memref<98xf32, #tpu.memory_space<smem>>
    %c61 = arith.constant 61 : index
    %61 = memref.load %arg2[%c61] : memref<98xf32, #tpu.memory_space<smem>>
    %c62 = arith.constant 62 : index
    %62 = memref.load %arg2[%c62] : memref<98xf32, #tpu.memory_space<smem>>
    %c63 = arith.constant 63 : index
    %63 = memref.load %arg2[%c63] : memref<98xf32, #tpu.memory_space<smem>>
    %c64 = arith.constant 64 : index
    %64 = memref.load %arg2[%c64] : memref<98xf32, #tpu.memory_space<smem>>
    %c65 = arith.constant 65 : index
    %65 = memref.load %arg2[%c65] : memref<98xf32, #tpu.memory_space<smem>>
    %c66 = arith.constant 66 : index
    %66 = memref.load %arg2[%c66] : memref<98xf32, #tpu.memory_space<smem>>
    %c67 = arith.constant 67 : index
    %67 = memref.load %arg2[%c67] : memref<98xf32, #tpu.memory_space<smem>>
    %c68 = arith.constant 68 : index
    %68 = memref.load %arg2[%c68] : memref<98xf32, #tpu.memory_space<smem>>
    %c69 = arith.constant 69 : index
    %69 = memref.load %arg2[%c69] : memref<98xf32, #tpu.memory_space<smem>>
    %c70 = arith.constant 70 : index
    %70 = memref.load %arg2[%c70] : memref<98xf32, #tpu.memory_space<smem>>
    %c71 = arith.constant 71 : index
    %71 = memref.load %arg2[%c71] : memref<98xf32, #tpu.memory_space<smem>>
    %c72 = arith.constant 72 : index
    %72 = memref.load %arg2[%c72] : memref<98xf32, #tpu.memory_space<smem>>
    %c73 = arith.constant 73 : index
    %73 = memref.load %arg2[%c73] : memref<98xf32, #tpu.memory_space<smem>>
    %c74 = arith.constant 74 : index
    %74 = memref.load %arg2[%c74] : memref<98xf32, #tpu.memory_space<smem>>
    %c75 = arith.constant 75 : index
    %75 = memref.load %arg2[%c75] : memref<98xf32, #tpu.memory_space<smem>>
    %c76 = arith.constant 76 : index
    %76 = memref.load %arg2[%c76] : memref<98xf32, #tpu.memory_space<smem>>
    %c77 = arith.constant 77 : index
    %77 = memref.load %arg2[%c77] : memref<98xf32, #tpu.memory_space<smem>>
    %c78 = arith.constant 78 : index
    %78 = memref.load %arg2[%c78] : memref<98xf32, #tpu.memory_space<smem>>
    %c79 = arith.constant 79 : index
    %79 = memref.load %arg2[%c79] : memref<98xf32, #tpu.memory_space<smem>>
    %c80 = arith.constant 80 : index
    %80 = memref.load %arg2[%c80] : memref<98xf32, #tpu.memory_space<smem>>
    %c81 = arith.constant 81 : index
    %81 = memref.load %arg2[%c81] : memref<98xf32, #tpu.memory_space<smem>>
    %c82 = arith.constant 82 : index
    %82 = memref.load %arg2[%c82] : memref<98xf32, #tpu.memory_space<smem>>
    %c83 = arith.constant 83 : index
    %83 = memref.load %arg2[%c83] : memref<98xf32, #tpu.memory_space<smem>>
    %c84 = arith.constant 84 : index
    %84 = memref.load %arg2[%c84] : memref<98xf32, #tpu.memory_space<smem>>
    %c85 = arith.constant 85 : index
    %85 = memref.load %arg2[%c85] : memref<98xf32, #tpu.memory_space<smem>>
    %c86 = arith.constant 86 : index
    %86 = memref.load %arg2[%c86] : memref<98xf32, #tpu.memory_space<smem>>
    %c87 = arith.constant 87 : index
    %87 = memref.load %arg2[%c87] : memref<98xf32, #tpu.memory_space<smem>>
    %c88 = arith.constant 88 : index
    %88 = memref.load %arg2[%c88] : memref<98xf32, #tpu.memory_space<smem>>
    %c89 = arith.constant 89 : index
    %89 = memref.load %arg2[%c89] : memref<98xf32, #tpu.memory_space<smem>>
    %c90 = arith.constant 90 : index
    %90 = memref.load %arg2[%c90] : memref<98xf32, #tpu.memory_space<smem>>
    %c91 = arith.constant 91 : index
    %91 = memref.load %arg2[%c91] : memref<98xf32, #tpu.memory_space<smem>>
    %c92 = arith.constant 92 : index
    %92 = memref.load %arg2[%c92] : memref<98xf32, #tpu.memory_space<smem>>
    %c93 = arith.constant 93 : index
    %93 = memref.load %arg2[%c93] : memref<98xf32, #tpu.memory_space<smem>>
    %c94 = arith.constant 94 : index
    %94 = memref.load %arg2[%c94] : memref<98xf32, #tpu.memory_space<smem>>
    %c95 = arith.constant 95 : index
    %95 = memref.load %arg2[%c95] : memref<98xf32, #tpu.memory_space<smem>>
    %c96 = arith.constant 96 : index
    %96 = memref.load %arg2[%c96] : memref<98xf32, #tpu.memory_space<smem>>
    %c97 = arith.constant 97 : index
    %97 = memref.load %arg2[%c97] : memref<98xf32, #tpu.memory_space<smem>>
    %c0_0 = arith.constant 0 : index
    %98 = memref.load %arg3[%c0_0] : memref<2xf32, #tpu.memory_space<smem>>
    %c1_1 = arith.constant 1 : index
    %99 = memref.load %arg3[%c1_1] : memref<2xf32, #tpu.memory_space<smem>>
    %cst = arith.constant 0.000000e+00 : f32
    %100 = vector.broadcast %cst : f32 to vector<2x22x128xf32>
    %c0_2 = arith.constant 0 : index
    %c0_3 = arith.constant 0 : index
    %c0_4 = arith.constant 0 : index
    %101 = vector.load %arg5[%c0_2, %c0_3, %c0_4] : memref<2x22x128xf32, #tpu.memory_space<vmem>>, vector<2x22x128xf32>
    tpu.vector_store %arg5[%c0_2, %c0_3, %c0_4], %100 {strides = array<i32>} : memref<2x22x128xf32, #tpu.memory_space<vmem>>, vector<2x22x128xf32>,
    %c0_5 = arith.constant 0 : index
    %c0_6 = arith.constant 0 : index
    %c0_7 = arith.constant 0 : index
    %102 = vector.load %arg1[%c0_5, %c0_6, %c0_7] : memref<1x4x256xf32, #tpu.memory_space<vmem>>, vector<1x4x256xf32>
    %103 = vector.shape_cast %102 : vector<1x4x256xf32> to vector<4x256xf32>
    %cst_8 = arith.constant dense<0xFF800000> : vector<256xf32>
    %104 = vector.multi_reduction <maximumf>, %103, %cst_8 [0] : vector<4x256xf32> to vector<256xf32>
    %105 = vector.shape_cast %104 : vector<256xf32> to vector<1x256xf32>
    %cst_9 = arith.constant dense<0.000000e+00> : vector<256xf32>
    %106 = vector.multi_reduction <add>, %103, %cst_9 [0] : vector<4x256xf32> to vector<256xf32>
    %107 = vector.shape_cast %106 : vector<256xf32> to vector<1x256xf32>
    %cst_10 = arith.constant 2.500000e-01 : f32
    %108 = vector.broadcast %cst_10 : f32 to vector<1x256xf32>
    %109 = arith.mulf %107, %108 : vector<1x256xf32>
    %110 = vector.extract_strided_slice %105 {offsets = [0, 0], sizes = [1, 16], strides = [1, 1]} : vector<1x256xf32> to vector<1x16xf32>
    %c0_11 = arith.constant 0 : index
    %c3_12 = arith.constant 3 : index
    %c3_13 = arith.constant 3 : index
    %111 = vector.load %arg5[%c0_11, %c3_12, %c3_13] : memref<2x22x128xf32, #tpu.memory_space<vmem>>, vector<1x1x16xf32>
    %112 = vector.shape_cast %111 : vector<1x1x16xf32> to vector<1x16xf32>
    %113 = vector.shape_cast %110 : vector<1x16xf32> to vector<1x1x16xf32>
    tpu.vector_store %arg5[%c0_11, %c3_12, %c3_13], %113 {strides = array<i32>} : memref<2x22x128xf32, #tpu.memory_space<vmem>>, vector<1x1x16xf32>,
    %114 = vector.extract_strided_slice %109 {offsets = [0, 0], sizes = [1, 16], strides = [1, 1]} : vector<1x256xf32> to vector<1x16xf32>
    %c1_14 = arith.constant 1 : index
    %c3_15 = arith.constant 3 : index
    %c3_16 = arith.constant 3 : index
    %115 = vector.load %arg5[%c1_14, %c3_15, %c3_16] : memref<2x22x128xf32, #tpu.memory_space<vmem>>, vector<1x1x16xf32>
    %116 = vector.shape_cast %115 : vector<1x1x16xf32> to vector<1x16xf32>
    %117 = vector.shape_cast %114 : vector<1x16xf32> to vector<1x1x16xf32>
    tpu.vector_store %arg5[%c1_14, %c3_15, %c3_16], %117 {strides = array<i32>} : memref<2x22x128xf32, #tpu.memory_space<vmem>>, vector<1x1x16xf32>,
    %118 = vector.extract_strided_slice %105 {offsets = [0, 16], sizes = [1, 16], strides = [1, 1]} : vector<1x256xf32> to vector<1x16xf32>
    %c0_17 = arith.constant 0 : index
    %c4_18 = arith.constant 4 : index
    %c3_19 = arith.constant 3 : index
    %119 = vector.load %arg5[%c0_17, %c4_18, %c3_19] : memref<2x22x128xf32, #tpu.memory_space<vmem>>, vector<1x1x16xf32>
    %120 = vector.shape_cast %119 : vector<1x1x16xf32> to vector<1x16xf32>
    %121 = vector.shape_cast %118 : vector<1x16xf32> to vector<1x1x16xf32>
    tpu.vector_store %arg5[%c0_17, %c4_18, %c3_19], %121 {strides = array<i32>} : memref<2x22x128xf32, #tpu.memory_space<vmem>>, vector<1x1x16xf32>,
    %122 = vector.extract_strided_slice %109 {offsets = [0, 16], sizes = [1, 16], strides = [1, 1]} : vector<1x256xf32> to vector<1x16xf32>
    %c1_20 = arith.constant 1 : index
    %c4_21 = arith.constant 4 : index
    %c3_22 = arith.constant 3 : index
    %123 = vector.load %arg5[%c1_20, %c4_21, %c3_22] : memref<2x22x128xf32, #tpu.memory_space<vmem>>, vector<1x1x16xf32>
    %124 = vector.shape_cast %123 : vector<1x1x16xf32> to vector<1x16xf32>
    %125 = vector.shape_cast %122 : vector<1x16xf32> to vector<1x1x16xf32>
    tpu.vector_store %arg5[%c1_20, %c4_21, %c3_22], %125 {strides = array<i32>} : memref<2x22x128xf32, #tpu.memory_space<vmem>>, vector<1x1x16xf32>,
    %126 = vector.extract_strided_slice %105 {offsets = [0, 32], sizes = [1, 16], strides = [1, 1]} : vector<1x256xf32> to vector<1x16xf32>
    %c0_23 = arith.constant 0 : index
    %c5_24 = arith.constant 5 : index
    %c3_25 = arith.constant 3 : index
    %127 = vector.load %arg5[%c0_23, %c5_24, %c3_25] : memref<2x22x128xf32, #tpu.memory_space<vmem>>, vector<1x1x16xf32>
    %128 = vector.shape_cast %127 : vector<1x1x16xf32> to vector<1x16xf32>
    %129 = vector.shape_cast %126 : vector<1x16xf32> to vector<1x1x16xf32>
    tpu.vector_store %arg5[%c0_23, %c5_24, %c3_25], %129 {strides = array<i32>} : memref<2x22x128xf32, #tpu.memory_space<vmem>>, vector<1x1x16xf32>,
    %130 = vector.extract_strided_slice %109 {offsets = [0, 32], sizes = [1, 16], strides = [1, 1]} : vector<1x256xf32> to vector<1x16xf32>
    %c1_26 = arith.constant 1 : index
    %c5_27 = arith.constant 5 : index
    %c3_28 = arith.constant 3 : index
    %131 = vector.load %arg5[%c1_26, %c5_27, %c3_28] : memref<2x22x128xf32, #tpu.memory_space<vmem>>, vector<1x1x16xf32>
    %132 = vector.shape_cast %131 : vector<1x1x16xf32> to vector<1x16xf32>
    %133 = vector.shape_cast %130 : vector<1x16xf32> to vector<1x1x16xf32>
    tpu.vector_store %arg5[%c1_26, %c5_27, %c3_28], %133 {strides = array<i32>} : memref<2x22x128xf32, #tpu.memory_space<vmem>>, vector<1x1x16xf32>,
    %134 = vector.extract_strided_slice %105 {offsets = [0, 48], sizes = [1, 16], strides = [1, 1]} : vector<1x256xf32> to vector<1x16xf32>
    %c0_29 = arith.constant 0 : index
    %c6_30 = arith.constant 6 : index
    %c3_31 = arith.constant 3 : index
    %135 = vector.load %arg5[%c0_29, %c6_30, %c3_31] : memref<2x22x128xf32, #tpu.memory_space<vmem>>, vector<1x1x16xf32>
    %136 = vector.shape_cast %135 : vector<1x1x16xf32> to vector<1x16xf32>
    %137 = vector.shape_cast %134 : vector<1x16xf32> to vector<1x1x16xf32>
    tpu.vector_store %arg5[%c0_29, %c6_30, %c3_31], %137 {strides = array<i32>} : memref<2x22x128xf32, #tpu.memory_space<vmem>>, vector<1x1x16xf32>,
    %138 = vector.extract_strided_slice %109 {offsets = [0, 48], sizes = [1, 16], strides = [1, 1]} : vector<1x256xf32> to vector<1x16xf32>
    %c1_32 = arith.constant 1 : index
    %c6_33 = arith.constant 6 : index
    %c3_34 = arith.constant 3 : index
    %139 = vector.load %arg5[%c1_32, %c6_33, %c3_34] : memref<2x22x128xf32, #tpu.memory_space<vmem>>, vector<1x1x16xf32>
    %140 = vector.shape_cast %139 : vector<1x1x16xf32> to vector<1x16xf32>
    %141 = vector.shape_cast %138 : vector<1x16xf32> to vector<1x1x16xf32>
    tpu.vector_store %arg5[%c1_32, %c6_33, %c3_34], %141 {strides = array<i32>} : memref<2x22x128xf32, #tpu.memory_space<vmem>>, vector<1x1x16xf32>,
    %142 = vector.extract_strided_slice %105 {offsets = [0, 64], sizes = [1, 16], strides = [1, 1]} : vector<1x256xf32> to vector<1x16xf32>
    %c0_35 = arith.constant 0 : index
    %c7_36 = arith.constant 7 : index
    %c3_37 = arith.constant 3 : index
    %143 = vector.load %arg5[%c0_35, %c7_36, %c3_37] : memref<2x22x128xf32, #tpu.memory_space<vmem>>, vector<1x1x16xf32>
    %144 = vector.shape_cast %143 : vector<1x1x16xf32> to vector<1x16xf32>
    %145 = vector.shape_cast %142 : vector<1x16xf32> to vector<1x1x16xf32>
    tpu.vector_store %arg5[%c0_35, %c7_36, %c3_37], %145 {strides = array<i32>} : memref<2x22x128xf32, #tpu.memory_space<vmem>>, vector<1x1x16xf32>,
    %146 = vector.extract_strided_slice %109 {offsets = [0, 64], sizes = [1, 16], strides = [1, 1]} : vector<1x256xf32> to vector<1x16xf32>
    %c1_38 = arith.constant 1 : index
    %c7_39 = arith.constant 7 : index
    %c3_40 = arith.constant 3 : index
    %147 = vector.load %arg5[%c1_38, %c7_39, %c3_40] : memref<2x22x128xf32, #tpu.memory_space<vmem>>, vector<1x1x16xf32>
    %148 = vector.shape_cast %147 : vector<1x1x16xf32> to vector<1x16xf32>
    %149 = vector.shape_cast %146 : vector<1x16xf32> to vector<1x1x16xf32>
    tpu.vector_store %arg5[%c1_38, %c7_39, %c3_40], %149 {strides = array<i32>} : memref<2x22x128xf32, #tpu.memory_space<vmem>>, vector<1x1x16xf32>,
    %150 = vector.extract_strided_slice %105 {offsets = [0, 80], sizes = [1, 16], strides = [1, 1]} : vector<1x256xf32> to vector<1x16xf32>
    %c0_41 = arith.constant 0 : index
    %c8_42 = arith.constant 8 : index
    %c3_43 = arith.constant 3 : index
    %151 = vector.load %arg5[%c0_41, %c8_42, %c3_43] : memref<2x22x128xf32, #tpu.memory_space<vmem>>, vector<1x1x16xf32>
    %152 = vector.shape_cast %151 : vector<1x1x16xf32> to vector<1x16xf32>
    %153 = vector.shape_cast %150 : vector<1x16xf32> to vector<1x1x16xf32>
    tpu.vector_store %arg5[%c0_41, %c8_42, %c3_43], %153 {strides = array<i32>} : memref<2x22x128xf32, #tpu.memory_space<vmem>>, vector<1x1x16xf32>,
    %154 = vector.extract_strided_slice %109 {offsets = [0, 80], sizes = [1, 16], strides = [1, 1]} : vector<1x256xf32> to vector<1x16xf32>
    %c1_44 = arith.constant 1 : index
    %c8_45 = arith.constant 8 : index
    %c3_46 = arith.constant 3 : index
    %155 = vector.load %arg5[%c1_44, %c8_45, %c3_46] : memref<2x22x128xf32, #tpu.memory_space<vmem>>, vector<1x1x16xf32>
    %156 = vector.shape_cast %155 : vector<1x1x16xf32> to vector<1x16xf32>
    %157 = vector.shape_cast %154 : vector<1x16xf32> to vector<1x1x16xf32>
    tpu.vector_store %arg5[%c1_44, %c8_45, %c3_46], %157 {strides = array<i32>} : memref<2x22x128xf32, #tpu.memory_space<vmem>>, vector<1x1x16xf32>,
    %158 = vector.extract_strided_slice %105 {offsets = [0, 96], sizes = [1, 16], strides = [1, 1]} : vector<1x256xf32> to vector<1x16xf32>
    %c0_47 = arith.constant 0 : index
    %c9_48 = arith.constant 9 : index
    %c3_49 = arith.constant 3 : index
    %159 = vector.load %arg5[%c0_47, %c9_48, %c3_49] : memref<2x22x128xf32, #tpu.memory_space<vmem>>, vector<1x1x16xf32>
    %160 = vector.shape_cast %159 : vector<1x1x16xf32> to vector<1x16xf32>
    %161 = vector.shape_cast %158 : vector<1x16xf32> to vector<1x1x16xf32>
    tpu.vector_store %arg5[%c0_47, %c9_48, %c3_49], %161 {strides = array<i32>} : memref<2x22x128xf32, #tpu.memory_space<vmem>>, vector<1x1x16xf32>,
    %162 = vector.extract_strided_slice %109 {offsets = [0, 96], sizes = [1, 16], strides = [1, 1]} : vector<1x256xf32> to vector<1x16xf32>
    %c1_50 = arith.constant 1 : index
    %c9_51 = arith.constant 9 : index
    %c3_52 = arith.constant 3 : index
    %163 = vector.load %arg5[%c1_50, %c9_51, %c3_52] : memref<2x22x128xf32, #tpu.memory_space<vmem>>, vector<1x1x16xf32>
    %164 = vector.shape_cast %163 : vector<1x1x16xf32> to vector<1x16xf32>
    %165 = vector.shape_cast %162 : vector<1x16xf32> to vector<1x1x16xf32>
    tpu.vector_store %arg5[%c1_50, %c9_51, %c3_52], %165 {strides = array<i32>} : memref<2x22x128xf32, #tpu.memory_space<vmem>>, vector<1x1x16xf32>,
    %166 = vector.extract_strided_slice %105 {offsets = [0, 112], sizes = [1, 16], strides = [1, 1]} : vector<1x256xf32> to vector<1x16xf32>
    %c0_53 = arith.constant 0 : index
    %c10_54 = arith.constant 10 : index
    %c3_55 = arith.constant 3 : index
    %167 = vector.load %arg5[%c0_53, %c10_54, %c3_55] : memref<2x22x128xf32, #tpu.memory_space<vmem>>, vector<1x1x16xf32>
    %168 = vector.shape_cast %167 : vector<1x1x16xf32> to vector<1x16xf32>
    %169 = vector.shape_cast %166 : vector<1x16xf32> to vector<1x1x16xf32>
    tpu.vector_store %arg5[%c0_53, %c10_54, %c3_55], %169 {strides = array<i32>} : memref<2x22x128xf32, #tpu.memory_space<vmem>>, vector<1x1x16xf32>,
    %170 = vector.extract_strided_slice %109 {offsets = [0, 112], sizes = [1, 16], strides = [1, 1]} : vector<1x256xf32> to vector<1x16xf32>
    %c1_56 = arith.constant 1 : index
    %c10_57 = arith.constant 10 : index
    %c3_58 = arith.constant 3 : index
    %171 = vector.load %arg5[%c1_56, %c10_57, %c3_58] : memref<2x22x128xf32, #tpu.memory_space<vmem>>, vector<1x1x16xf32>
    %172 = vector.shape_cast %171 : vector<1x1x16xf32> to vector<1x16xf32>
    %173 = vector.shape_cast %170 : vector<1x16xf32> to vector<1x1x16xf32>
    tpu.vector_store %arg5[%c1_56, %c10_57, %c3_58], %173 {strides = array<i32>} : memref<2x22x128xf32, #tpu.memory_space<vmem>>, vector<1x1x16xf32>,
    %174 = vector.extract_strided_slice %105 {offsets = [0, 128], sizes = [1, 16], strides = [1, 1]} : vector<1x256xf32> to vector<1x16xf32>
    %c0_59 = arith.constant 0 : index
    %c11_60 = arith.constant 11 : index
    %c3_61 = arith.constant 3 : index
    %175 = vector.load %arg5[%c0_59, %c11_60, %c3_61] : memref<2x22x128xf32, #tpu.memory_space<vmem>>, vector<1x1x16xf32>
    %176 = vector.shape_cast %175 : vector<1x1x16xf32> to vector<1x16xf32>
    %177 = vector.shape_cast %174 : vector<1x16xf32> to vector<1x1x16xf32>
    tpu.vector_store %arg5[%c0_59, %c11_60, %c3_61], %177 {strides = array<i32>} : memref<2x22x128xf32, #tpu.memory_space<vmem>>, vector<1x1x16xf32>,
    %178 = vector.extract_strided_slice %109 {offsets = [0, 128], sizes = [1, 16], strides = [1, 1]} : vector<1x256xf32> to vector<1x16xf32>
    %c1_62 = arith.constant 1 : index
    %c11_63 = arith.constant 11 : index
    %c3_64 = arith.constant 3 : index
    %179 = vector.load %arg5[%c1_62, %c11_63, %c3_64] : memref<2x22x128xf32, #tpu.memory_space<vmem>>, vector<1x1x16xf32>
    %180 = vector.shape_cast %179 : vector<1x1x16xf32> to vector<1x16xf32>
    %181 = vector.shape_cast %178 : vector<1x16xf32> to vector<1x1x16xf32>
    tpu.vector_store %arg5[%c1_62, %c11_63, %c3_64], %181 {strides = array<i32>} : memref<2x22x128xf32, #tpu.memory_space<vmem>>, vector<1x1x16xf32>,
    %182 = vector.extract_strided_slice %105 {offsets = [0, 144], sizes = [1, 16], strides = [1, 1]} : vector<1x256xf32> to vector<1x16xf32>
    %c0_65 = arith.constant 0 : index
    %c12_66 = arith.constant 12 : index
    %c3_67 = arith.constant 3 : index
    %183 = vector.load %arg5[%c0_65, %c12_66, %c3_67] : memref<2x22x128xf32, #tpu.memory_space<vmem>>, vector<1x1x16xf32>
    %184 = vector.shape_cast %183 : vector<1x1x16xf32> to vector<1x16xf32>
    %185 = vector.shape_cast %182 : vector<1x16xf32> to vector<1x1x16xf32>
    tpu.vector_store %arg5[%c0_65, %c12_66, %c3_67], %185 {strides = array<i32>} : memref<2x22x128xf32, #tpu.memory_space<vmem>>, vector<1x1x16xf32>,
    %186 = vector.extract_strided_slice %109 {offsets = [0, 144], sizes = [1, 16], strides = [1, 1]} : vector<1x256xf32> to vector<1x16xf32>
    %c1_68 = arith.constant 1 : index
    %c12_69 = arith.constant 12 : index
    %c3_70 = arith.constant 3 : index
    %187 = vector.load %arg5[%c1_68, %c12_69, %c3_70] : memref<2x22x128xf32, #tpu.memory_space<vmem>>, vector<1x1x16xf32>
    %188 = vector.shape_cast %187 : vector<1x1x16xf32> to vector<1x16xf32>
    %189 = vector.shape_cast %186 : vector<1x16xf32> to vector<1x1x16xf32>
    tpu.vector_store %arg5[%c1_68, %c12_69, %c3_70], %189 {strides = array<i32>} : memref<2x22x128xf32, #tpu.memory_space<vmem>>, vector<1x1x16xf32>,
    %190 = vector.extract_strided_slice %105 {offsets = [0, 160], sizes = [1, 16], strides = [1, 1]} : vector<1x256xf32> to vector<1x16xf32>
    %c0_71 = arith.constant 0 : index
    %c13_72 = arith.constant 13 : index
    %c3_73 = arith.constant 3 : index
    %191 = vector.load %arg5[%c0_71, %c13_72, %c3_73] : memref<2x22x128xf32, #tpu.memory_space<vmem>>, vector<1x1x16xf32>
    %192 = vector.shape_cast %191 : vector<1x1x16xf32> to vector<1x16xf32>
    %193 = vector.shape_cast %190 : vector<1x16xf32> to vector<1x1x16xf32>
    tpu.vector_store %arg5[%c0_71, %c13_72, %c3_73], %193 {strides = array<i32>} : memref<2x22x128xf32, #tpu.memory_space<vmem>>, vector<1x1x16xf32>,
    %194 = vector.extract_strided_slice %109 {offsets = [0, 160], sizes = [1, 16], strides = [1, 1]} : vector<1x256xf32> to vector<1x16xf32>
    %c1_74 = arith.constant 1 : index
    %c13_75 = arith.constant 13 : index
    %c3_76 = arith.constant 3 : index
    %195 = vector.load %arg5[%c1_74, %c13_75, %c3_76] : memref<2x22x128xf32, #tpu.memory_space<vmem>>, vector<1x1x16xf32>
    %196 = vector.shape_cast %195 : vector<1x1x16xf32> to vector<1x16xf32>
    %197 = vector.shape_cast %194 : vector<1x16xf32> to vector<1x1x16xf32>
    tpu.vector_store %arg5[%c1_74, %c13_75, %c3_76], %197 {strides = array<i32>} : memref<2x22x128xf32, #tpu.memory_space<vmem>>, vector<1x1x16xf32>,
    %198 = vector.extract_strided_slice %105 {offsets = [0, 176], sizes = [1, 16], strides = [1, 1]} : vector<1x256xf32> to vector<1x16xf32>
    %c0_77 = arith.constant 0 : index
    %c14_78 = arith.constant 14 : index
    %c3_79 = arith.constant 3 : index
    %199 = vector.load %arg5[%c0_77, %c14_78, %c3_79] : memref<2x22x128xf32, #tpu.memory_space<vmem>>, vector<1x1x16xf32>
    %200 = vector.shape_cast %199 : vector<1x1x16xf32> to vector<1x16xf32>
    %201 = vector.shape_cast %198 : vector<1x16xf32> to vector<1x1x16xf32>
    tpu.vector_store %arg5[%c0_77, %c14_78, %c3_79], %201 {strides = array<i32>} : memref<2x22x128xf32, #tpu.memory_space<vmem>>, vector<1x1x16xf32>,
    %202 = vector.extract_strided_slice %109 {offsets = [0, 176], sizes = [1, 16], strides = [1, 1]} : vector<1x256xf32> to vector<1x16xf32>
    %c1_80 = arith.constant 1 : index
    %c14_81 = arith.constant 14 : index
    %c3_82 = arith.constant 3 : index
    %203 = vector.load %arg5[%c1_80, %c14_81, %c3_82] : memref<2x22x128xf32, #tpu.memory_space<vmem>>, vector<1x1x16xf32>
    %204 = vector.shape_cast %203 : vector<1x1x16xf32> to vector<1x16xf32>
    %205 = vector.shape_cast %202 : vector<1x16xf32> to vector<1x1x16xf32>
    tpu.vector_store %arg5[%c1_80, %c14_81, %c3_82], %205 {strides = array<i32>} : memref<2x22x128xf32, #tpu.memory_space<vmem>>, vector<1x1x16xf32>,
    %206 = vector.extract_strided_slice %105 {offsets = [0, 192], sizes = [1, 16], strides = [1, 1]} : vector<1x256xf32> to vector<1x16xf32>
    %c0_83 = arith.constant 0 : index
    %c15_84 = arith.constant 15 : index
    %c3_85 = arith.constant 3 : index
    %207 = vector.load %arg5[%c0_83, %c15_84, %c3_85] : memref<2x22x128xf32, #tpu.memory_space<vmem>>, vector<1x1x16xf32>
    %208 = vector.shape_cast %207 : vector<1x1x16xf32> to vector<1x16xf32>
    %209 = vector.shape_cast %206 : vector<1x16xf32> to vector<1x1x16xf32>
    tpu.vector_store %arg5[%c0_83, %c15_84, %c3_85], %209 {strides = array<i32>} : memref<2x22x128xf32, #tpu.memory_space<vmem>>, vector<1x1x16xf32>,
    %210 = vector.extract_strided_slice %109 {offsets = [0, 192], sizes = [1, 16], strides = [1, 1]} : vector<1x256xf32> to vector<1x16xf32>
    %c1_86 = arith.constant 1 : index
    %c15_87 = arith.constant 15 : index
    %c3_88 = arith.constant 3 : index
    %211 = vector.load %arg5[%c1_86, %c15_87, %c3_88] : memref<2x22x128xf32, #tpu.memory_space<vmem>>, vector<1x1x16xf32>
    %212 = vector.shape_cast %211 : vector<1x1x16xf32> to vector<1x16xf32>
    %213 = vector.shape_cast %210 : vector<1x16xf32> to vector<1x1x16xf32>
    tpu.vector_store %arg5[%c1_86, %c15_87, %c3_88], %213 {strides = array<i32>} : memref<2x22x128xf32, #tpu.memory_space<vmem>>, vector<1x1x16xf32>,
    %214 = vector.extract_strided_slice %105 {offsets = [0, 208], sizes = [1, 16], strides = [1, 1]} : vector<1x256xf32> to vector<1x16xf32>
    %c0_89 = arith.constant 0 : index
    %c16_90 = arith.constant 16 : index
    %c3_91 = arith.constant 3 : index
    %215 = vector.load %arg5[%c0_89, %c16_90, %c3_91] : memref<2x22x128xf32, #tpu.memory_space<vmem>>, vector<1x1x16xf32>
    %216 = vector.shape_cast %215 : vector<1x1x16xf32> to vector<1x16xf32>
    %217 = vector.shape_cast %214 : vector<1x16xf32> to vector<1x1x16xf32>
    tpu.vector_store %arg5[%c0_89, %c16_90, %c3_91], %217 {strides = array<i32>} : memref<2x22x128xf32, #tpu.memory_space<vmem>>, vector<1x1x16xf32>,
    %218 = vector.extract_strided_slice %109 {offsets = [0, 208], sizes = [1, 16], strides = [1, 1]} : vector<1x256xf32> to vector<1x16xf32>
    %c1_92 = arith.constant 1 : index
    %c16_93 = arith.constant 16 : index
    %c3_94 = arith.constant 3 : index
    %219 = vector.load %arg5[%c1_92, %c16_93, %c3_94] : memref<2x22x128xf32, #tpu.memory_space<vmem>>, vector<1x1x16xf32>
    %220 = vector.shape_cast %219 : vector<1x1x16xf32> to vector<1x16xf32>
    %221 = vector.shape_cast %218 : vector<1x16xf32> to vector<1x1x16xf32>
    tpu.vector_store %arg5[%c1_92, %c16_93, %c3_94], %221 {strides = array<i32>} : memref<2x22x128xf32, #tpu.memory_space<vmem>>, vector<1x1x16xf32>,
    %222 = vector.extract_strided_slice %105 {offsets = [0, 224], sizes = [1, 16], strides = [1, 1]} : vector<1x256xf32> to vector<1x16xf32>
    %c0_95 = arith.constant 0 : index
    %c17_96 = arith.constant 17 : index
    %c3_97 = arith.constant 3 : index
    %223 = vector.load %arg5[%c0_95, %c17_96, %c3_97] : memref<2x22x128xf32, #tpu.memory_space<vmem>>, vector<1x1x16xf32>
    %224 = vector.shape_cast %223 : vector<1x1x16xf32> to vector<1x16xf32>
    %225 = vector.shape_cast %222 : vector<1x16xf32> to vector<1x1x16xf32>
    tpu.vector_store %arg5[%c0_95, %c17_96, %c3_97], %225 {strides = array<i32>} : memref<2x22x128xf32, #tpu.memory_space<vmem>>, vector<1x1x16xf32>,
    %226 = vector.extract_strided_slice %109 {offsets = [0, 224], sizes = [1, 16], strides = [1, 1]} : vector<1x256xf32> to vector<1x16xf32>
    %c1_98 = arith.constant 1 : index
    %c17_99 = arith.constant 17 : index
    %c3_100 = arith.constant 3 : index
    %227 = vector.load %arg5[%c1_98, %c17_99, %c3_100] : memref<2x22x128xf32, #tpu.memory_space<vmem>>, vector<1x1x16xf32>
    %228 = vector.shape_cast %227 : vector<1x1x16xf32> to vector<1x16xf32>
    %229 = vector.shape_cast %226 : vector<1x16xf32> to vector<1x1x16xf32>
    tpu.vector_store %arg5[%c1_98, %c17_99, %c3_100], %229 {strides = array<i32>} : memref<2x22x128xf32, #tpu.memory_space<vmem>>, vector<1x1x16xf32>,
    %230 = vector.extract_strided_slice %105 {offsets = [0, 240], sizes = [1, 16], strides = [1, 1]} : vector<1x256xf32> to vector<1x16xf32>
    %c0_101 = arith.constant 0 : index
    %c18_102 = arith.constant 18 : index
    %c3_103 = arith.constant 3 : index
    %231 = vector.load %arg5[%c0_101, %c18_102, %c3_103] : memref<2x22x128xf32, #tpu.memory_space<vmem>>, vector<1x1x16xf32>
    %232 = vector.shape_cast %231 : vector<1x1x16xf32> to vector<1x16xf32>
    %233 = vector.shape_cast %230 : vector<1x16xf32> to vector<1x1x16xf32>
    tpu.vector_store %arg5[%c0_101, %c18_102, %c3_103], %233 {strides = array<i32>} : memref<2x22x128xf32, #tpu.memory_space<vmem>>, vector<1x1x16xf32>,
    %234 = vector.extract_strided_slice %109 {offsets = [0, 240], sizes = [1, 16], strides = [1, 1]} : vector<1x256xf32> to vector<1x16xf32>
    %c1_104 = arith.constant 1 : index
    %c18_105 = arith.constant 18 : index
    %c3_106 = arith.constant 3 : index
    %235 = vector.load %arg5[%c1_104, %c18_105, %c3_106] : memref<2x22x128xf32, #tpu.memory_space<vmem>>, vector<1x1x16xf32>
    %236 = vector.shape_cast %235 : vector<1x1x16xf32> to vector<1x16xf32>
    %237 = vector.shape_cast %234 : vector<1x16xf32> to vector<1x1x16xf32>
    tpu.vector_store %arg5[%c1_104, %c18_105, %c3_106], %237 {strides = array<i32>} : memref<2x22x128xf32, #tpu.memory_space<vmem>>, vector<1x1x16xf32>,
    %c0_107 = arith.constant 0 : index
    %c0_108 = arith.constant 0 : index
    %c0_109 = arith.constant 0 : index
    %238 = vector.load %arg5[%c0_107, %c0_108, %c0_109] : memref<2x22x128xf32, #tpu.memory_space<vmem>>, vector<1x16x128xf32>
    %239 = vector.shape_cast %238 : vector<1x16x128xf32> to vector<16x128xf32>
    %240 = vector.broadcast %0 : f32 to vector<16x128xf32>
    %241 = arith.mulf %240, %239 : vector<16x128xf32>
    %242 = vector.broadcast %1 : f32 to vector<16x128xf32>
    %243 = arith.mulf %242, %239 : vector<16x128xf32>
    %244 = vector.broadcast %2 : f32 to vector<16x128xf32>
    %245 = arith.mulf %244, %239 : vector<16x128xf32>
    %246 = vector.broadcast %3 : f32 to vector<16x128xf32>
    %247 = arith.mulf %246, %239 : vector<16x128xf32>
    %248 = vector.broadcast %4 : f32 to vector<16x128xf32>
    %249 = arith.mulf %248, %239 : vector<16x128xf32>
    %250 = vector.broadcast %5 : f32 to vector<16x128xf32>
    %251 = arith.mulf %250, %239 : vector<16x128xf32>
    %252 = vector.broadcast %6 : f32 to vector<16x128xf32>
    %253 = arith.mulf %252, %239 : vector<16x128xf32>
    %c0_110 = arith.constant 0 : index
    %c1_111 = arith.constant 1 : index
    %c0_112 = arith.constant 0 : index
    %254 = vector.load %arg5[%c0_110, %c1_111, %c0_112] : memref<2x22x128xf32, #tpu.memory_space<vmem>>, vector<1x16x128xf32>
    %255 = vector.shape_cast %254 : vector<1x16x128xf32> to vector<16x128xf32>
    %256 = vector.broadcast %7 : f32 to vector<16x128xf32>
    %257 = arith.mulf %256, %255 : vector<16x128xf32>
    %258 = arith.addf %241, %257 : vector<16x128xf32>
    %259 = vector.broadcast %8 : f32 to vector<16x128xf32>
    %260 = arith.mulf %259, %255 : vector<16x128xf32>
    %261 = arith.addf %243, %260 : vector<16x128xf32>
    %262 = vector.broadcast %9 : f32 to vector<16x128xf32>
    %263 = arith.mulf %262, %255 : vector<16x128xf32>
    %264 = arith.addf %245, %263 : vector<16x128xf32>
    %265 = vector.broadcast %10 : f32 to vector<16x128xf32>
    %266 = arith.mulf %265, %255 : vector<16x128xf32>
    %267 = arith.addf %247, %266 : vector<16x128xf32>
    %268 = vector.broadcast %11 : f32 to vector<16x128xf32>
    %269 = arith.mulf %268, %255 : vector<16x128xf32>
    %270 = arith.addf %249, %269 : vector<16x128xf32>
    %271 = vector.broadcast %12 : f32 to vector<16x128xf32>
    %272 = arith.mulf %271, %255 : vector<16x128xf32>
    %273 = arith.addf %251, %272 : vector<16x128xf32>
    %274 = vector.broadcast %13 : f32 to vector<16x128xf32>
    %275 = arith.mulf %274, %255 : vector<16x128xf32>
    %276 = arith.addf %253, %275 : vector<16x128xf32>
    %c0_113 = arith.constant 0 : index
    %c2_114 = arith.constant 2 : index
    %c0_115 = arith.constant 0 : index
    %277 = vector.load %arg5[%c0_113, %c2_114, %c0_115] : memref<2x22x128xf32, #tpu.memory_space<vmem>>, vector<1x16x128xf32>
    %278 = vector.shape_cast %277 : vector<1x16x128xf32> to vector<16x128xf32>
    %279 = vector.broadcast %14 : f32 to vector<16x128xf32>
    %280 = arith.mulf %279, %278 : vector<16x128xf32>
    %281 = arith.addf %258, %280 : vector<16x128xf32>
    %282 = vector.broadcast %15 : f32 to vector<16x128xf32>
    %283 = arith.mulf %282, %278 : vector<16x128xf32>
    %284 = arith.addf %261, %283 : vector<16x128xf32>
    %285 = vector.broadcast %16 : f32 to vector<16x128xf32>
    %286 = arith.mulf %285, %278 : vector<16x128xf32>
    %287 = arith.addf %264, %286 : vector<16x128xf32>
    %288 = vector.broadcast %17 : f32 to vector<16x128xf32>
    %289 = arith.mulf %288, %278 : vector<16x128xf32>
    %290 = arith.addf %267, %289 : vector<16x128xf32>
    %291 = vector.broadcast %18 : f32 to vector<16x128xf32>
    %292 = arith.mulf %291, %278 : vector<16x128xf32>
    %293 = arith.addf %270, %292 : vector<16x128xf32>
    %294 = vector.broadcast %19 : f32 to vector<16x128xf32>
    %295 = arith.mulf %294, %278 : vector<16x128xf32>
    %296 = arith.addf %273, %295 : vector<16x128xf32>
    %297 = vector.broadcast %20 : f32 to vector<16x128xf32>
    %298 = arith.mulf %297, %278 : vector<16x128xf32>
    %299 = arith.addf %276, %298 : vector<16x128xf32>
    %c0_116 = arith.constant 0 : index
    %c3_117 = arith.constant 3 : index
    %c0_118 = arith.constant 0 : index
    %300 = vector.load %arg5[%c0_116, %c3_117, %c0_118] : memref<2x22x128xf32, #tpu.memory_space<vmem>>, vector<1x16x128xf32>
    %301 = vector.shape_cast %300 : vector<1x16x128xf32> to vector<16x128xf32>
    %302 = vector.broadcast %21 : f32 to vector<16x128xf32>
    %303 = arith.mulf %302, %301 : vector<16x128xf32>
    %304 = arith.addf %281, %303 : vector<16x128xf32>
    %305 = vector.broadcast %22 : f32 to vector<16x128xf32>
    %306 = arith.mulf %305, %301 : vector<16x128xf32>
    %307 = arith.addf %284, %306 : vector<16x128xf32>
    %308 = vector.broadcast %23 : f32 to vector<16x128xf32>
    %309 = arith.mulf %308, %301 : vector<16x128xf32>
    %310 = arith.addf %287, %309 : vector<16x128xf32>
    %311 = vector.broadcast %24 : f32 to vector<16x128xf32>
    %312 = arith.mulf %311, %301 : vector<16x128xf32>
    %313 = arith.addf %290, %312 : vector<16x128xf32>
    %314 = vector.broadcast %25 : f32 to vector<16x128xf32>
    %315 = arith.mulf %314, %301 : vector<16x128xf32>
    %316 = arith.addf %293, %315 : vector<16x128xf32>
    %317 = vector.broadcast %26 : f32 to vector<16x128xf32>
    %318 = arith.mulf %317, %301 : vector<16x128xf32>
    %319 = arith.addf %296, %318 : vector<16x128xf32>
    %320 = vector.broadcast %27 : f32 to vector<16x128xf32>
    %321 = arith.mulf %320, %301 : vector<16x128xf32>
    %322 = arith.addf %299, %321 : vector<16x128xf32>
    %c0_119 = arith.constant 0 : index
    %c4_120 = arith.constant 4 : index
    %c0_121 = arith.constant 0 : index
    %323 = vector.load %arg5[%c0_119, %c4_120, %c0_121] : memref<2x22x128xf32, #tpu.memory_space<vmem>>, vector<1x16x128xf32>
    %324 = vector.shape_cast %323 : vector<1x16x128xf32> to vector<16x128xf32>
    %325 = vector.broadcast %28 : f32 to vector<16x128xf32>
    %326 = arith.mulf %325, %324 : vector<16x128xf32>
    %327 = arith.addf %304, %326 : vector<16x128xf32>
    %328 = vector.broadcast %29 : f32 to vector<16x128xf32>
    %329 = arith.mulf %328, %324 : vector<16x128xf32>
    %330 = arith.addf %307, %329 : vector<16x128xf32>
    %331 = vector.broadcast %30 : f32 to vector<16x128xf32>
    %332 = arith.mulf %331, %324 : vector<16x128xf32>
    %333 = arith.addf %310, %332 : vector<16x128xf32>
    %334 = vector.broadcast %31 : f32 to vector<16x128xf32>
    %335 = arith.mulf %334, %324 : vector<16x128xf32>
    %336 = arith.addf %313, %335 : vector<16x128xf32>
    %337 = vector.broadcast %32 : f32 to vector<16x128xf32>
    %338 = arith.mulf %337, %324 : vector<16x128xf32>
    %339 = arith.addf %316, %338 : vector<16x128xf32>
    %340 = vector.broadcast %33 : f32 to vector<16x128xf32>
    %341 = arith.mulf %340, %324 : vector<16x128xf32>
    %342 = arith.addf %319, %341 : vector<16x128xf32>
    %343 = vector.broadcast %34 : f32 to vector<16x128xf32>
    %344 = arith.mulf %343, %324 : vector<16x128xf32>
    %345 = arith.addf %322, %344 : vector<16x128xf32>
    %c0_122 = arith.constant 0 : index
    %c5_123 = arith.constant 5 : index
    %c0_124 = arith.constant 0 : index
    %346 = vector.load %arg5[%c0_122, %c5_123, %c0_124] : memref<2x22x128xf32, #tpu.memory_space<vmem>>, vector<1x16x128xf32>
    %347 = vector.shape_cast %346 : vector<1x16x128xf32> to vector<16x128xf32>
    %348 = vector.broadcast %35 : f32 to vector<16x128xf32>
    %349 = arith.mulf %348, %347 : vector<16x128xf32>
    %350 = arith.addf %327, %349 : vector<16x128xf32>
    %351 = vector.broadcast %36 : f32 to vector<16x128xf32>
    %352 = arith.mulf %351, %347 : vector<16x128xf32>
    %353 = arith.addf %330, %352 : vector<16x128xf32>
    %354 = vector.broadcast %37 : f32 to vector<16x128xf32>
    %355 = arith.mulf %354, %347 : vector<16x128xf32>
    %356 = arith.addf %333, %355 : vector<16x128xf32>
    %357 = vector.broadcast %38 : f32 to vector<16x128xf32>
    %358 = arith.mulf %357, %347 : vector<16x128xf32>
    %359 = arith.addf %336, %358 : vector<16x128xf32>
    %360 = vector.broadcast %39 : f32 to vector<16x128xf32>
    %361 = arith.mulf %360, %347 : vector<16x128xf32>
    %362 = arith.addf %339, %361 : vector<16x128xf32>
    %363 = vector.broadcast %40 : f32 to vector<16x128xf32>
    %364 = arith.mulf %363, %347 : vector<16x128xf32>
    %365 = arith.addf %342, %364 : vector<16x128xf32>
    %366 = vector.broadcast %41 : f32 to vector<16x128xf32>
    %367 = arith.mulf %366, %347 : vector<16x128xf32>
    %368 = arith.addf %345, %367 : vector<16x128xf32>
    %c0_125 = arith.constant 0 : index
    %c6_126 = arith.constant 6 : index
    %c0_127 = arith.constant 0 : index
    %369 = vector.load %arg5[%c0_125, %c6_126, %c0_127] : memref<2x22x128xf32, #tpu.memory_space<vmem>>, vector<1x16x128xf32>
    %370 = vector.shape_cast %369 : vector<1x16x128xf32> to vector<16x128xf32>
    %371 = vector.broadcast %42 : f32 to vector<16x128xf32>
    %372 = arith.mulf %371, %370 : vector<16x128xf32>
    %373 = arith.addf %350, %372 : vector<16x128xf32>
    %374 = vector.broadcast %43 : f32 to vector<16x128xf32>
    %375 = arith.mulf %374, %370 : vector<16x128xf32>
    %376 = arith.addf %353, %375 : vector<16x128xf32>
    %377 = vector.broadcast %44 : f32 to vector<16x128xf32>
    %378 = arith.mulf %377, %370 : vector<16x128xf32>
    %379 = arith.addf %356, %378 : vector<16x128xf32>
    %380 = vector.broadcast %45 : f32 to vector<16x128xf32>
    %381 = arith.mulf %380, %370 : vector<16x128xf32>
    %382 = arith.addf %359, %381 : vector<16x128xf32>
    %383 = vector.broadcast %46 : f32 to vector<16x128xf32>
    %384 = arith.mulf %383, %370 : vector<16x128xf32>
    %385 = arith.addf %362, %384 : vector<16x128xf32>
    %386 = vector.broadcast %47 : f32 to vector<16x128xf32>
    %387 = arith.mulf %386, %370 : vector<16x128xf32>
    %388 = arith.addf %365, %387 : vector<16x128xf32>
    %389 = vector.broadcast %48 : f32 to vector<16x128xf32>
    %390 = arith.mulf %389, %370 : vector<16x128xf32>
    %391 = arith.addf %368, %390 : vector<16x128xf32>
    %c1_128 = arith.constant 1 : index
    %c0_129 = arith.constant 0 : index
    %c0_130 = arith.constant 0 : index
    %392 = vector.load %arg5[%c1_128, %c0_129, %c0_130] : memref<2x22x128xf32, #tpu.memory_space<vmem>>, vector<1x16x128xf32>
    %393 = vector.shape_cast %392 : vector<1x16x128xf32> to vector<16x128xf32>
    %394 = vector.broadcast %49 : f32 to vector<16x128xf32>
    %395 = arith.mulf %394, %393 : vector<16x128xf32>
    %396 = arith.addf %373, %395 : vector<16x128xf32>
    %397 = vector.broadcast %50 : f32 to vector<16x128xf32>
    %398 = arith.mulf %397, %393 : vector<16x128xf32>
    %399 = arith.addf %376, %398 : vector<16x128xf32>
    %400 = vector.broadcast %51 : f32 to vector<16x128xf32>
    %401 = arith.mulf %400, %393 : vector<16x128xf32>
    %402 = arith.addf %379, %401 : vector<16x128xf32>
    %403 = vector.broadcast %52 : f32 to vector<16x128xf32>
    %404 = arith.mulf %403, %393 : vector<16x128xf32>
    %405 = arith.addf %382, %404 : vector<16x128xf32>
    %406 = vector.broadcast %53 : f32 to vector<16x128xf32>
    %407 = arith.mulf %406, %393 : vector<16x128xf32>
    %408 = arith.addf %385, %407 : vector<16x128xf32>
    %409 = vector.broadcast %54 : f32 to vector<16x128xf32>
    %410 = arith.mulf %409, %393 : vector<16x128xf32>
    %411 = arith.addf %388, %410 : vector<16x128xf32>
    %412 = vector.broadcast %55 : f32 to vector<16x128xf32>
    %413 = arith.mulf %412, %393 : vector<16x128xf32>
    %414 = arith.addf %391, %413 : vector<16x128xf32>
    %c1_131 = arith.constant 1 : index
    %c1_132 = arith.constant 1 : index
    %c0_133 = arith.constant 0 : index
    %415 = vector.load %arg5[%c1_131, %c1_132, %c0_133] : memref<2x22x128xf32, #tpu.memory_space<vmem>>, vector<1x16x128xf32>
    %416 = vector.shape_cast %415 : vector<1x16x128xf32> to vector<16x128xf32>
    %417 = vector.broadcast %56 : f32 to vector<16x128xf32>
    %418 = arith.mulf %417, %416 : vector<16x128xf32>
    %419 = arith.addf %396, %418 : vector<16x128xf32>
    %420 = vector.broadcast %57 : f32 to vector<16x128xf32>
    %421 = arith.mulf %420, %416 : vector<16x128xf32>
    %422 = arith.addf %399, %421 : vector<16x128xf32>
    %423 = vector.broadcast %58 : f32 to vector<16x128xf32>
    %424 = arith.mulf %423, %416 : vector<16x128xf32>
    %425 = arith.addf %402, %424 : vector<16x128xf32>
    %426 = vector.broadcast %59 : f32 to vector<16x128xf32>
    %427 = arith.mulf %426, %416 : vector<16x128xf32>
    %428 = arith.addf %405, %427 : vector<16x128xf32>
    %429 = vector.broadcast %60 : f32 to vector<16x128xf32>
    %430 = arith.mulf %429, %416 : vector<16x128xf32>
    %431 = arith.addf %408, %430 : vector<16x128xf32>
    %432 = vector.broadcast %61 : f32 to vector<16x128xf32>
    %433 = arith.mulf %432, %416 : vector<16x128xf32>
    %434 = arith.addf %411, %433 : vector<16x128xf32>
    %435 = vector.broadcast %62 : f32 to vector<16x128xf32>
    %436 = arith.mulf %435, %416 : vector<16x128xf32>
    %437 = arith.addf %414, %436 : vector<16x128xf32>
    %c1_134 = arith.constant 1 : index
    %c2_135 = arith.constant 2 : index
    %c0_136 = arith.constant 0 : index
    %438 = vector.load %arg5[%c1_134, %c2_135, %c0_136] : memref<2x22x128xf32, #tpu.memory_space<vmem>>, vector<1x16x128xf32>
    %439 = vector.shape_cast %438 : vector<1x16x128xf32> to vector<16x128xf32>
    %440 = vector.broadcast %63 : f32 to vector<16x128xf32>
    %441 = arith.mulf %440, %439 : vector<16x128xf32>
    %442 = arith.addf %419, %441 : vector<16x128xf32>
    %443 = vector.broadcast %64 : f32 to vector<16x128xf32>
    %444 = arith.mulf %443, %439 : vector<16x128xf32>
    %445 = arith.addf %422, %444 : vector<16x128xf32>
    %446 = vector.broadcast %65 : f32 to vector<16x128xf32>
    %447 = arith.mulf %446, %439 : vector<16x128xf32>
    %448 = arith.addf %425, %447 : vector<16x128xf32>
    %449 = vector.broadcast %66 : f32 to vector<16x128xf32>
    %450 = arith.mulf %449, %439 : vector<16x128xf32>
    %451 = arith.addf %428, %450 : vector<16x128xf32>
    %452 = vector.broadcast %67 : f32 to vector<16x128xf32>
    %453 = arith.mulf %452, %439 : vector<16x128xf32>
    %454 = arith.addf %431, %453 : vector<16x128xf32>
    %455 = vector.broadcast %68 : f32 to vector<16x128xf32>
    %456 = arith.mulf %455, %439 : vector<16x128xf32>
    %457 = arith.addf %434, %456 : vector<16x128xf32>
    %458 = vector.broadcast %69 : f32 to vector<16x128xf32>
    %459 = arith.mulf %458, %439 : vector<16x128xf32>
    %460 = arith.addf %437, %459 : vector<16x128xf32>
    %c1_137 = arith.constant 1 : index
    %c3_138 = arith.constant 3 : index
    %c0_139 = arith.constant 0 : index
    %461 = vector.load %arg5[%c1_137, %c3_138, %c0_139] : memref<2x22x128xf32, #tpu.memory_space<vmem>>, vector<1x16x128xf32>
    %462 = vector.shape_cast %461 : vector<1x16x128xf32> to vector<16x128xf32>
    %463 = vector.broadcast %70 : f32 to vector<16x128xf32>
    %464 = arith.mulf %463, %462 : vector<16x128xf32>
    %465 = arith.addf %442, %464 : vector<16x128xf32>
    %466 = vector.broadcast %71 : f32 to vector<16x128xf32>
    %467 = arith.mulf %466, %462 : vector<16x128xf32>
    %468 = arith.addf %445, %467 : vector<16x128xf32>
    %469 = vector.broadcast %72 : f32 to vector<16x128xf32>
    %470 = arith.mulf %469, %462 : vector<16x128xf32>
    %471 = arith.addf %448, %470 : vector<16x128xf32>
    %472 = vector.broadcast %73 : f32 to vector<16x128xf32>
    %473 = arith.mulf %472, %462 : vector<16x128xf32>
    %474 = arith.addf %451, %473 : vector<16x128xf32>
    %475 = vector.broadcast %74 : f32 to vector<16x128xf32>
    %476 = arith.mulf %475, %462 : vector<16x128xf32>
    %477 = arith.addf %454, %476 : vector<16x128xf32>
    %478 = vector.broadcast %75 : f32 to vector<16x128xf32>
    %479 = arith.mulf %478, %462 : vector<16x128xf32>
    %480 = arith.addf %457, %479 : vector<16x128xf32>
    %481 = vector.broadcast %76 : f32 to vector<16x128xf32>
    %482 = arith.mulf %481, %462 : vector<16x128xf32>
    %483 = arith.addf %460, %482 : vector<16x128xf32>
    %c1_140 = arith.constant 1 : index
    %c4_141 = arith.constant 4 : index
    %c0_142 = arith.constant 0 : index
    %484 = vector.load %arg5[%c1_140, %c4_141, %c0_142] : memref<2x22x128xf32, #tpu.memory_space<vmem>>, vector<1x16x128xf32>
    %485 = vector.shape_cast %484 : vector<1x16x128xf32> to vector<16x128xf32>
    %486 = vector.broadcast %77 : f32 to vector<16x128xf32>
    %487 = arith.mulf %486, %485 : vector<16x128xf32>
    %488 = arith.addf %465, %487 : vector<16x128xf32>
    %489 = vector.broadcast %78 : f32 to vector<16x128xf32>
    %490 = arith.mulf %489, %485 : vector<16x128xf32>
    %491 = arith.addf %468, %490 : vector<16x128xf32>
    %492 = vector.broadcast %79 : f32 to vector<16x128xf32>
    %493 = arith.mulf %492, %485 : vector<16x128xf32>
    %494 = arith.addf %471, %493 : vector<16x128xf32>
    %495 = vector.broadcast %80 : f32 to vector<16x128xf32>
    %496 = arith.mulf %495, %485 : vector<16x128xf32>
    %497 = arith.addf %474, %496 : vector<16x128xf32>
    %498 = vector.broadcast %81 : f32 to vector<16x128xf32>
    %499 = arith.mulf %498, %485 : vector<16x128xf32>
    %500 = arith.addf %477, %499 : vector<16x128xf32>
    %501 = vector.broadcast %82 : f32 to vector<16x128xf32>
    %502 = arith.mulf %501, %485 : vector<16x128xf32>
    %503 = arith.addf %480, %502 : vector<16x128xf32>
    %504 = vector.broadcast %83 : f32 to vector<16x128xf32>
    %505 = arith.mulf %504, %485 : vector<16x128xf32>
    %506 = arith.addf %483, %505 : vector<16x128xf32>
    %c1_143 = arith.constant 1 : index
    %c5_144 = arith.constant 5 : index
    %c0_145 = arith.constant 0 : index
    %507 = vector.load %arg5[%c1_143, %c5_144, %c0_145] : memref<2x22x128xf32, #tpu.memory_space<vmem>>, vector<1x16x128xf32>
    %508 = vector.shape_cast %507 : vector<1x16x128xf32> to vector<16x128xf32>
    %509 = vector.broadcast %84 : f32 to vector<16x128xf32>
    %510 = arith.mulf %509, %508 : vector<16x128xf32>
    %511 = arith.addf %488, %510 : vector<16x128xf32>
    %512 = vector.broadcast %85 : f32 to vector<16x128xf32>
    %513 = arith.mulf %512, %508 : vector<16x128xf32>
    %514 = arith.addf %491, %513 : vector<16x128xf32>
    %515 = vector.broadcast %86 : f32 to vector<16x128xf32>
    %516 = arith.mulf %515, %508 : vector<16x128xf32>
    %517 = arith.addf %494, %516 : vector<16x128xf32>
    %518 = vector.broadcast %87 : f32 to vector<16x128xf32>
    %519 = arith.mulf %518, %508 : vector<16x128xf32>
    %520 = arith.addf %497, %519 : vector<16x128xf32>
    %521 = vector.broadcast %88 : f32 to vector<16x128xf32>
    %522 = arith.mulf %521, %508 : vector<16x128xf32>
    %523 = arith.addf %500, %522 : vector<16x128xf32>
    %524 = vector.broadcast %89 : f32 to vector<16x128xf32>
    %525 = arith.mulf %524, %508 : vector<16x128xf32>
    %526 = arith.addf %503, %525 : vector<16x128xf32>
    %527 = vector.broadcast %90 : f32 to vector<16x128xf32>
    %528 = arith.mulf %527, %508 : vector<16x128xf32>
    %529 = arith.addf %506, %528 : vector<16x128xf32>
    %c1_146 = arith.constant 1 : index
    %c6_147 = arith.constant 6 : index
    %c0_148 = arith.constant 0 : index
    %530 = vector.load %arg5[%c1_146, %c6_147, %c0_148] : memref<2x22x128xf32, #tpu.memory_space<vmem>>, vector<1x16x128xf32>
    %531 = vector.shape_cast %530 : vector<1x16x128xf32> to vector<16x128xf32>
    %532 = vector.broadcast %91 : f32 to vector<16x128xf32>
    %533 = arith.mulf %532, %531 : vector<16x128xf32>
    %534 = arith.addf %511, %533 : vector<16x128xf32>
    %535 = vector.broadcast %92 : f32 to vector<16x128xf32>
    %536 = arith.mulf %535, %531 : vector<16x128xf32>
    %537 = arith.addf %514, %536 : vector<16x128xf32>
    %538 = vector.broadcast %93 : f32 to vector<16x128xf32>
    %539 = arith.mulf %538, %531 : vector<16x128xf32>
    %540 = arith.addf %517, %539 : vector<16x128xf32>
    %541 = vector.broadcast %94 : f32 to vector<16x128xf32>
    %542 = arith.mulf %541, %531 : vector<16x128xf32>
    %543 = arith.addf %520, %542 : vector<16x128xf32>
    %544 = vector.broadcast %95 : f32 to vector<16x128xf32>
    %545 = arith.mulf %544, %531 : vector<16x128xf32>
    %546 = arith.addf %523, %545 : vector<16x128xf32>
    %547 = vector.broadcast %96 : f32 to vector<16x128xf32>
    %548 = arith.mulf %547, %531 : vector<16x128xf32>
    %549 = arith.addf %526, %548 : vector<16x128xf32>
    %550 = vector.broadcast %97 : f32 to vector<16x128xf32>
    %551 = arith.mulf %550, %531 : vector<16x128xf32>
    %552 = arith.addf %529, %551 : vector<16x128xf32>
    %c127_i32 = arith.constant 127 : i32
    %553 = tpu.dynamic_rotate %537 by %c127_i32 dim 1 : vector<16x128xf32>, i32 -> vector<16x128xf32>
    %554 = arith.addf %534, %553 : vector<16x128xf32>
    %c126_i32 = arith.constant 126 : i32
    %555 = tpu.dynamic_rotate %540 by %c126_i32 dim 1 : vector<16x128xf32>, i32 -> vector<16x128xf32>
    %556 = arith.addf %554, %555 : vector<16x128xf32>
    %c125_i32 = arith.constant 125 : i32
    %557 = tpu.dynamic_rotate %543 by %c125_i32 dim 1 : vector<16x128xf32>, i32 -> vector<16x128xf32>
    %558 = arith.addf %556, %557 : vector<16x128xf32>
    %c124_i32 = arith.constant 124 : i32
    %559 = tpu.dynamic_rotate %546 by %c124_i32 dim 1 : vector<16x128xf32>, i32 -> vector<16x128xf32>
    %560 = arith.addf %558, %559 : vector<16x128xf32>
    %c123_i32 = arith.constant 123 : i32
    %561 = tpu.dynamic_rotate %549 by %c123_i32 dim 1 : vector<16x128xf32>, i32 -> vector<16x128xf32>
    %562 = arith.addf %560, %561 : vector<16x128xf32>
    %c122_i32 = arith.constant 122 : i32
    %563 = tpu.dynamic_rotate %552 by %c122_i32 dim 1 : vector<16x128xf32>, i32 -> vector<16x128xf32>
    %564 = arith.addf %562, %563 : vector<16x128xf32>
    %565 = vector.broadcast %98 : f32 to vector<16x128xf32>
    %566 = arith.mulf %564, %565 : vector<16x128xf32>
    %567 = vector.broadcast %99 : f32 to vector<16x128xf32>
    %568 = arith.addf %566, %567 : vector<16x128xf32>
    %569 = arith.negf %568 : vector<16x128xf32>
    %570 = math.exp %569 : vector<16x128xf32>
    %cst_149 = arith.constant 1.000000e+00 : f32
    %571 = vector.broadcast %cst_149 : f32 to vector<16x128xf32>
    %572 = arith.addf %571, %570 : vector<16x128xf32>
    %573 = arith.divf %571, %572 : vector<16x128xf32>
    %574 = vector.extract_strided_slice %573 {offsets = [0, 0], sizes = [1, 16], strides = [1, 1]} : vector<16x128xf32> to vector<1x16xf32>
    %c0_150 = arith.constant 0 : index
    %c0_151 = arith.constant 0 : index
    %575 = vector.load %arg6[%c0_150, %c0_151] : memref<1x256xf32, #tpu.memory_space<vmem>>, vector<1x16xf32>
    tpu.vector_store %arg6[%c0_150, %c0_151], %574 {strides = array<i32>} : memref<1x256xf32, #tpu.memory_space<vmem>>, vector<1x16xf32>,
    %576 = vector.extract_strided_slice %573 {offsets = [1, 0], sizes = [1, 16], strides = [1, 1]} : vector<16x128xf32> to vector<1x16xf32>
    %c0_152 = arith.constant 0 : index
    %c16_153 = arith.constant 16 : index
    %577 = vector.load %arg6[%c0_152, %c16_153] : memref<1x256xf32, #tpu.memory_space<vmem>>, vector<1x16xf32>
    tpu.vector_store %arg6[%c0_152, %c16_153], %576 {strides = array<i32>} : memref<1x256xf32, #tpu.memory_space<vmem>>, vector<1x16xf32>,
    %578 = vector.extract_strided_slice %573 {offsets = [2, 0], sizes = [1, 16], strides = [1, 1]} : vector<16x128xf32> to vector<1x16xf32>
    %c0_154 = arith.constant 0 : index
    %c32_155 = arith.constant 32 : index
    %579 = vector.load %arg6[%c0_154, %c32_155] : memref<1x256xf32, #tpu.memory_space<vmem>>, vector<1x16xf32>
    tpu.vector_store %arg6[%c0_154, %c32_155], %578 {strides = array<i32>} : memref<1x256xf32, #tpu.memory_space<vmem>>, vector<1x16xf32>,
    %580 = vector.extract_strided_slice %573 {offsets = [3, 0], sizes = [1, 16], strides = [1, 1]} : vector<16x128xf32> to vector<1x16xf32>
    %c0_156 = arith.constant 0 : index
    %c48_157 = arith.constant 48 : index
    %581 = vector.load %arg6[%c0_156, %c48_157] : memref<1x256xf32, #tpu.memory_space<vmem>>, vector<1x16xf32>
    tpu.vector_store %arg6[%c0_156, %c48_157], %580 {strides = array<i32>} : memref<1x256xf32, #tpu.memory_space<vmem>>, vector<1x16xf32>,
    %582 = vector.extract_strided_slice %573 {offsets = [4, 0], sizes = [1, 16], strides = [1, 1]} : vector<16x128xf32> to vector<1x16xf32>
    %c0_158 = arith.constant 0 : index
    %c64_159 = arith.constant 64 : index
    %583 = vector.load %arg6[%c0_158, %c64_159] : memref<1x256xf32, #tpu.memory_space<vmem>>, vector<1x16xf32>
    tpu.vector_store %arg6[%c0_158, %c64_159], %582 {strides = array<i32>} : memref<1x256xf32, #tpu.memory_space<vmem>>, vector<1x16xf32>,
    %584 = vector.extract_strided_slice %573 {offsets = [5, 0], sizes = [1, 16], strides = [1, 1]} : vector<16x128xf32> to vector<1x16xf32>
    %c0_160 = arith.constant 0 : index
    %c80_161 = arith.constant 80 : index
    %585 = vector.load %arg6[%c0_160, %c80_161] : memref<1x256xf32, #tpu.memory_space<vmem>>, vector<1x16xf32>
    tpu.vector_store %arg6[%c0_160, %c80_161], %584 {strides = array<i32>} : memref<1x256xf32, #tpu.memory_space<vmem>>, vector<1x16xf32>,
    %586 = vector.extract_strided_slice %573 {offsets = [6, 0], sizes = [1, 16], strides = [1, 1]} : vector<16x128xf32> to vector<1x16xf32>
    %c0_162 = arith.constant 0 : index
    %c96_163 = arith.constant 96 : index
    %587 = vector.load %arg6[%c0_162, %c96_163] : memref<1x256xf32, #tpu.memory_space<vmem>>, vector<1x16xf32>
    tpu.vector_store %arg6[%c0_162, %c96_163], %586 {strides = array<i32>} : memref<1x256xf32, #tpu.memory_space<vmem>>, vector<1x16xf32>,
    %588 = vector.extract_strided_slice %573 {offsets = [7, 0], sizes = [1, 16], strides = [1, 1]} : vector<16x128xf32> to vector<1x16xf32>
    %c0_164 = arith.constant 0 : index
    %c112 = arith.constant 112 : index
    %589 = vector.load %arg6[%c0_164, %c112] : memref<1x256xf32, #tpu.memory_space<vmem>>, vector<1x16xf32>
    tpu.vector_store %arg6[%c0_164, %c112], %588 {strides = array<i32>} : memref<1x256xf32, #tpu.memory_space<vmem>>, vector<1x16xf32>,
    %590 = vector.extract_strided_slice %573 {offsets = [8, 0], sizes = [1, 16], strides = [1, 1]} : vector<16x128xf32> to vector<1x16xf32>
    %c0_165 = arith.constant 0 : index
    %c128 = arith.constant 128 : index
    %591 = vector.load %arg6[%c0_165, %c128] : memref<1x256xf32, #tpu.memory_space<vmem>>, vector<1x16xf32>
    tpu.vector_store %arg6[%c0_165, %c128], %590 {strides = array<i32>} : memref<1x256xf32, #tpu.memory_space<vmem>>, vector<1x16xf32>,
    %592 = vector.extract_strided_slice %573 {offsets = [9, 0], sizes = [1, 16], strides = [1, 1]} : vector<16x128xf32> to vector<1x16xf32>
    %c0_166 = arith.constant 0 : index
    %c144 = arith.constant 144 : index
    %593 = vector.load %arg6[%c0_166, %c144] : memref<1x256xf32, #tpu.memory_space<vmem>>, vector<1x16xf32>
    tpu.vector_store %arg6[%c0_166, %c144], %592 {strides = array<i32>} : memref<1x256xf32, #tpu.memory_space<vmem>>, vector<1x16xf32>,
    %594 = vector.extract_strided_slice %573 {offsets = [10, 0], sizes = [1, 16], strides = [1, 1]} : vector<16x128xf32> to vector<1x16xf32>
    %c0_167 = arith.constant 0 : index
    %c160 = arith.constant 160 : index
    %595 = vector.load %arg6[%c0_167, %c160] : memref<1x256xf32, #tpu.memory_space<vmem>>, vector<1x16xf32>
    tpu.vector_store %arg6[%c0_167, %c160], %594 {strides = array<i32>} : memref<1x256xf32, #tpu.memory_space<vmem>>, vector<1x16xf32>,
    %596 = vector.extract_strided_slice %573 {offsets = [11, 0], sizes = [1, 16], strides = [1, 1]} : vector<16x128xf32> to vector<1x16xf32>
    %c0_168 = arith.constant 0 : index
    %c176 = arith.constant 176 : index
    %597 = vector.load %arg6[%c0_168, %c176] : memref<1x256xf32, #tpu.memory_space<vmem>>, vector<1x16xf32>
    tpu.vector_store %arg6[%c0_168, %c176], %596 {strides = array<i32>} : memref<1x256xf32, #tpu.memory_space<vmem>>, vector<1x16xf32>,
    %598 = vector.extract_strided_slice %573 {offsets = [12, 0], sizes = [1, 16], strides = [1, 1]} : vector<16x128xf32> to vector<1x16xf32>
    %c0_169 = arith.constant 0 : index
    %c192 = arith.constant 192 : index
    %599 = vector.load %arg6[%c0_169, %c192] : memref<1x256xf32, #tpu.memory_space<vmem>>, vector<1x16xf32>
    tpu.vector_store %arg6[%c0_169, %c192], %598 {strides = array<i32>} : memref<1x256xf32, #tpu.memory_space<vmem>>, vector<1x16xf32>,
    %600 = vector.extract_strided_slice %573 {offsets = [13, 0], sizes = [1, 16], strides = [1, 1]} : vector<16x128xf32> to vector<1x16xf32>
    %c0_170 = arith.constant 0 : index
    %c208 = arith.constant 208 : index
    %601 = vector.load %arg6[%c0_170, %c208] : memref<1x256xf32, #tpu.memory_space<vmem>>, vector<1x16xf32>
    tpu.vector_store %arg6[%c0_170, %c208], %600 {strides = array<i32>} : memref<1x256xf32, #tpu.memory_space<vmem>>, vector<1x16xf32>,
    %602 = vector.extract_strided_slice %573 {offsets = [14, 0], sizes = [1, 16], strides = [1, 1]} : vector<16x128xf32> to vector<1x16xf32>
    %c0_171 = arith.constant 0 : index
    %c224 = arith.constant 224 : index
    %603 = vector.load %arg6[%c0_171, %c224] : memref<1x256xf32, #tpu.memory_space<vmem>>, vector<1x16xf32>
    tpu.vector_store %arg6[%c0_171, %c224], %602 {strides = array<i32>} : memref<1x256xf32, #tpu.memory_space<vmem>>, vector<1x16xf32>,
    %604 = vector.extract_strided_slice %573 {offsets = [15, 0], sizes = [1, 16], strides = [1, 1]} : vector<16x128xf32> to vector<1x16xf32>
    %c0_172 = arith.constant 0 : index
    %c240 = arith.constant 240 : index
    %605 = vector.load %arg6[%c0_172, %c240] : memref<1x256xf32, #tpu.memory_space<vmem>>, vector<1x16xf32>
    tpu.vector_store %arg6[%c0_172, %c240], %604 {strides = array<i32>} : memref<1x256xf32, #tpu.memory_space<vmem>>, vector<1x16xf32>,
    %c0_173 = arith.constant 0 : index
    %c0_174 = arith.constant 0 : index
    %606 = vector.load %arg6[%c0_173, %c0_174] : memref<1x256xf32, #tpu.memory_space<vmem>>, vector<1x256xf32>
    %c0_175 = arith.constant 0 : index
    %c0_176 = arith.constant 0 : index
    %c0_177 = arith.constant 0 : index
    %607 = vector.load %arg1[%c0_175, %c0_176, %c0_177] : memref<1x4x256xf32, #tpu.memory_space<vmem>>, vector<1x4x256xf32>
    %608 = vector.shape_cast %607 : vector<1x4x256xf32> to vector<4x256xf32>
    %609 = vector.broadcast %606 : vector<1x256xf32> to vector<4x256xf32>
    %610 = arith.mulf %608, %609 : vector<4x256xf32>
    %c0_178 = arith.constant 0 : index
    %c0_179 = arith.constant 0 : index
    %c0_180 = arith.constant 0 : index
    %611 = vector.load %arg4[%c0_178, %c0_179, %c0_180] : memref<1x4x256xf32, #tpu.memory_space<vmem>>, vector<1x4x256xf32>
    %612 = vector.shape_cast %611 : vector<1x4x256xf32> to vector<4x256xf32>
    %613 = vector.shape_cast %610 : vector<4x256xf32> to vector<1x4x256xf32>
    tpu.vector_store %arg4[%c0_178, %c0_179, %c0_180], %613 {strides = array<i32>} : memref<1x4x256xf32, #tpu.memory_space<vmem>>, vector<1x4x256xf32>,
    return
  }
  func.func @transform_0(%arg0: i32) -> (i32, i32, i32) {
    %c0_i32 = arith.constant 0 : i32
    %c0_i32_0 = arith.constant 0 : i32
    %c0_i32_1 = arith.constant 0 : i32
    return %arg0, %c0_i32, %c0_i32_0 : i32, i32, i32
  }
  func.func @transform_1(%arg0: i32) -> i32 {
    %c0_i32 = arith.constant 0 : i32
    %c0_i32_0 = arith.constant 0 : i32
    return %c0_i32 : i32
  }
  func.func @transform_2(%arg0: i32) -> i32 {
    %c0_i32 = arith.constant 0 : i32
    %c0_i32_0 = arith.constant 0 : i32
    return %c0_i32 : i32
  }
  func.func @transform_3(%arg0: i32) -> (i32, i32, i32) {
    %c0_i32 = arith.constant 0 : i32
    %c0_i32_0 = arith.constant 0 : i32
    %c0_i32_1 = arith.constant 0 : i32
    return %arg0, %c0_i32, %c0_i32_0 : i32, i32, i32
  }
}

</mosaic_0001>

<llo_original>
// kernel: tpu_custom_call.1
$region0: #{tpu_custom_call.1}
  #allocation0 [shape = 'u32[]', space=smem, size = 0x4, offset = 0x4, fixed_abs, tag = 'smem constant byte address 0x4 - core index']
  #allocation1 [shape = 'u32[72,128]{1,0:T(1,128)}', space=vmem, size = 0x9000, scoped, tag = 'internal scratch']
  #allocation2 [shape = 'f32[2,22,128]{2,1,0:T(8,128)}', space=vmem, size = 0x6000, scoped, tag = 'scratch operand']
  #allocation3 [shape = 'f32[1,256]{1,0:T(1,128)}', space=vmem, size = 0x400, scoped, tag = 'scratch operand']
  %s0 = inlined_call_operand.hbm [shape: f32[2,4,256], index: 0, kind: input, shape index: {}]
  %s1 = inlined_call_operand.hbm [shape: f32[98], index: 1, kind: input, shape index: {}]
  %s2 = inlined_call_operand.vmem [shape: f32[2], index: 2, kind: input, shape index: {}]
  %s3 = inlined_call_operand.hbm [shape: f32[2,4,256], index: 3, kind: output, shape index: {}]
  %s4 = sld [smem:[#allocation0]]
  $region57: #{tpu_custom_call.1} parent=0
    _
  %s6 = ssub.s32 1, %s4
  %s7 = scalar_select 0, %s6, %s4
  $region1: #{tpu_custom_call.1} parent=0
    #allocation4 [shape = 'u8[8192]{0}', space=vmem, size = 0x2000, scoped, tag = 'input window, operand 0']
    #allocation5 [shape = 's32[2]{0}', space=sflag, size = 0x8, scoped, tag = 'scoped memory for tpu_custom_call.1']
    #allocation6 [shape = 's32[2]{0}', space=sflag, size = 0x8, scoped, tag = 'scoped memory for tpu_custom_call.1']
    #allocation7 [shape = 's32[2]{0}', space=sflag, size = 0x8, scoped, tag = 'scoped memory for tpu_custom_call.1']
    #allocation8 [shape = 's32[2]{0}', space=sflag, size = 0x8, scoped, tag = 'scoped memory for tpu_custom_call.1']
    #allocation9 [shape = 'u8[512]{0}', space=smem, size = 0x200, scoped, tag = 'input window, operand 1, single buffered']
    #allocation10 [shape = 'u8[512]{0}', space=smem, size = 0x200, scoped, tag = 'input window, operand 2, single buffered']
    #allocation11 [shape = 'u8[8192]{0}', space=vmem, size = 0x2000, scoped, tag = 'output window, operand 0']
    %8 = vsyncpa [#allocation5], 0
    %s9 = scalar_lea.sflag [#allocation5], 1
    %10 = vsyncpa %s9, 0
    %11 = vsyncpa [#allocation7], 0
    %12 = vsyncpa [#allocation8], 0
    %13 = vsyncpa [#allocation6], 0
    %s14 = scalar_lea.sflag [#allocation6], 1
    %15 = vsyncpa %s14, 0
    loop: start=0, step=1, limit=4
    $region2: #{tpu_custom_call.1} parent=1 // loop_pre_header
      _
    $region3: #{tpu_custom_call.1} parent=1 // loop_header
      %s17 = sphi 0, %s21
      %p18 = scmp.ge.s32.totalorder %s17, 4
      %s27 = sphi 0, %s29
      %s30 = sphi 0, %s27
      %s31 = sphi 0, %s30
      %s47 = sphi 0, %s31
      %s51 = sphi 0, %s51
      %s53 = sphi 0, %s51
      %s54 = sphi 0, %s53
      %s68 = sphi 0, %s54
      %s72 = sphi 0, %s72
      %s74 = sphi 0, %s72
      %s75 = sphi 0, %s74
      %s89 = sphi 0, %s75
      %s95 = sphi 0, %s97
      %s98 = sphi 0, %s95
      %s99 = sphi 0, %s98
      %s115 = sphi 0, %s99
    $region4: #{tpu_custom_call.1} parent=1 // loop_header_branch
      %20 = sbr.rel (%p18) target = $region8
    $region5: #{tpu_custom_call.1} parent=1 // loop_body
      %s22 = ssub.s32 %s17, 1
      %s23 = ssub.s32 %s17, 2
      %s24 = sadd.s32 %s17, 1
      %s25 = ssub.s32 %s17, %s24
      %p26 = scmp.eq.s32.totalorder %s25, 0
      %s28 = sadd.s32 %s27, 1
      %s29 = scalar_select %p26, %s27, %s28
      %p32 = pneg %p26
      %p33 = scmp.eq.s32.totalorder %s17, 1
      %p34 = por %p32, %p33
      %p35 = scmp.ne.s32.totalorder %s27, %s30
      %p36 = scmp.eq.s32.totalorder %s17, 0
      %p37 = por %p35, %p36
      %p38 = scmp.ne.s32.totalorder %s27, %s30
      %p39 = scmp.eq.s32.totalorder %s22, 1
      %p40 = por %p38, %p39
      %p41 = scmp.ne.s32.totalorder %s30, %s31
      %p42 = scmp.eq.s32.totalorder %s22, 0
      %p43 = por %p41, %p42
      %p44 = scmp.ne.s32.totalorder %s30, %s31
      %p45 = scmp.eq.s32.totalorder %s23, 1
      %p46 = por %p44, %p45
      %p48 = scmp.ne.s32.totalorder %s31, %s47
      %p49 = scmp.eq.s32.totalorder %s23, 0
      %p50 = por %p48, %p49
      %s52 = sadd.s32 %s51, 1
      %p55 = scmp.eq.s32.totalorder %s17, 1
      %p56 = scmp.ne.s32.totalorder %s51, %s53
      %p57 = scmp.eq.s32.totalorder %s17, 0
      %p58 = por %p56, %p57
      %p59 = scmp.ne.s32.totalorder %s51, %s53
      %p60 = scmp.eq.s32.totalorder %s22, 1
      %p61 = por %p59, %p60
      %p62 = scmp.ne.s32.totalorder %s53, %s54
      %p63 = scmp.eq.s32.totalorder %s22, 0
      %p64 = por %p62, %p63
      %p65 = scmp.ne.s32.totalorder %s53, %s54
      %p66 = scmp.eq.s32.totalorder %s23, 1
      %p67 = por %p65, %p66
      %p69 = scmp.ne.s32.totalorder %s54, %s68
      %p70 = scmp.eq.s32.totalorder %s23, 0
      %p71 = por %p69, %p70
      %s73 = sadd.s32 %s72, 1
      %p76 = scmp.eq.s32.totalorder %s17, 1
      %p77 = scmp.ne.s32.totalorder %s72, %s74
      %p78 = scmp.eq.s32.totalorder %s17, 0
      %p79 = por %p77, %p78
      %p80 = scmp.ne.s32.totalorder %s72, %s74
      %p81 = scmp.eq.s32.totalorder %s22, 1
      %p82 = por %p80, %p81
      %p83 = scmp.ne.s32.totalorder %s74, %s75
      %p84 = scmp.eq.s32.totalorder %s22, 0
      %p85 = por %p83, %p84
      %p86 = scmp.ne.s32.totalorder %s74, %s75
      %p87 = scmp.eq.s32.totalorder %s23, 1
      %p88 = por %p86, %p87
      %p90 = scmp.ne.s32.totalorder %s75, %s89
      %p91 = scmp.eq.s32.totalorder %s23, 0
      %p92 = por %p90, %p91
      %s93 = ssub.s32 %s17, %s24
      %p94 = scmp.eq.s32.totalorder %s93, 0
      %s96 = sadd.s32 %s95, 1
      %s97 = scalar_select %p94, %s95, %s96
      %p100 = pneg %p94
      %p101 = scmp.eq.s32.totalorder %s17, 1
      %p102 = por %p100, %p101
      %p103 = scmp.ne.s32.totalorder %s95, %s98
      %p104 = scmp.eq.s32.totalorder %s17, 0
      %p105 = por %p103, %p104
      %p106 = scmp.ne.s32.totalorder %s95, %s98
      %p107 = scmp.eq.s32.totalorder %s22, 1
      %p108 = por %p106, %p107
      %p109 = scmp.ne.s32.totalorder %s98, %s99
      %p110 = scmp.eq.s32.totalorder %s22, 0
      %p111 = por %p109, %p110
      %p112 = scmp.ne.s32.totalorder %s98, %s99
      %p113 = scmp.eq.s32.totalorder %s23, 1
      %p114 = por %p112, %p113
      %p116 = scmp.ne.s32.totalorder %s99, %s115
      %p117 = scmp.eq.s32.totalorder %s23, 0
      %p118 = por %p116, %p117
      %p119 = scmp.le.s32.totalorder 1, %s17
      %p120 = scmp.lt.s32.totalorder %s17, 3
      %p121 = pnand %p119, %p120
      %p122 = pneg %p121
      // Predicated region
      $region9: #{tpu_custom_call.1} parent=5 // pred_check
        _
      $region10: #{tpu_custom_call.1} parent=5 // pred_check_branch
        %124 = sbr.rel (%p121) target = $region12
      $region11: #{tpu_custom_call.1} parent=5 // pred_region
        %s125 = ssub.s32 %s17, 1
        // Predicated region
        $region13: #{tpu_custom_call.1} parent=11 // pred_check
          %p126 = pneg %p64
        $region14: #{tpu_custom_call.1} parent=11 // pred_check_branch
          %128 = sbr.rel (%p126) target = $region16
        $region15: #{tpu_custom_call.1} parent=11 // pred_region
          %130 = vsyncadd [#allocation7], 0
          %s132 = sshll.u32 %s1, 4
          %s133 = int_to_ptr.hbm [resolvable:$true] %s132
          %135 = dma.hbm_to_smem %s133, 16, [#allocation9], [#allocation7]
        $region16: #{tpu_custom_call.1} parent=11 // pred_fallthru
          _
        // Predicated region
        $region17: #{tpu_custom_call.1} parent=11 // pred_check
          %p136 = pneg %p85
        $region18: #{tpu_custom_call.1} parent=11 // pred_check_branch
          %138 = sbr.rel (%p136) target = $region20
        $region19: #{tpu_custom_call.1} parent=11 // pred_region
          %140 = vsyncadd [#allocation8], 0
          %s142 = sshll.u32 %s2, 4
          %s143 = int_to_ptr.vmem [resolvable:$true] %s142
          %145 = dma.vmem_to_smem %s143, 16, [#allocation10], [#allocation8]
        $region20: #{tpu_custom_call.1} parent=11 // pred_fallthru
          _
      $region12: #{tpu_custom_call.1} parent=5 // pred_fallthru
        _
      %p146 = scmp.lt.s32.totalorder %s17, 2
      // Predicated region
      $region21: #{tpu_custom_call.1} parent=5 // pred_check
        %p147 = pneg %p146
      $region22: #{tpu_custom_call.1} parent=5 // pred_check_branch
        %149 = sbr.rel (%p147) target = $region24
      $region23: #{tpu_custom_call.1} parent=5 // pred_region
        // Predicated region
        $region25: #{tpu_custom_call.1} parent=23 // pred_check
          %p150 = pneg %p37
        $region26: #{tpu_custom_call.1} parent=23 // pred_check_branch
          %152 = sbr.rel (%p150) target = $region28
        $region27: #{tpu_custom_call.1} parent=23 // pred_region
          %s153 = sand.u32 %s27, 1
          %s154 = scalar_lea.sflag [#allocation5], %s153
          %s155 = sand.u32 %s27, 1
          %s156 = smul.addr %s155, 8
          %s157 = scalar_lea.vmem [#allocation4], %s156
          %159 = vsyncadd %s154, 0
          %s160 = smul.addr %s17, 2
          %s161 = smul.addr %s160, 4
          %s162 = scalar_lea.hbm %s0, %s161
          %s164 = sshll.u32 %s162, 4
          %s165 = int_to_ptr.hbm [resolvable:$true] %s164
          %s166 = sshll.u32 %s157, 4
          %s167 = int_to_ptr.vmem [resolvable:$true] %s166
          %169 = dma.hbm_to_vmem [thread:$0]  %s165, 128, %s167, %s154
        $region28: #{tpu_custom_call.1} parent=23 // pred_fallthru
          _
      $region24: #{tpu_custom_call.1} parent=5 // pred_fallthru
        _
      %p170 = scmp.le.s32.totalorder 1, %s17
      %p171 = scmp.lt.s32.totalorder %s17, 3
      %p172 = pnand %p170, %p171
      %p173 = pneg %p172
      // Predicated region
      $region29: #{tpu_custom_call.1} parent=5 // pred_check
        _
      $region30: #{tpu_custom_call.1} parent=5 // pred_check_branch
        %175 = sbr.rel (%p172) target = $region32
      $region31: #{tpu_custom_call.1} parent=5 // pred_region
        %s176 = ssub.s32 %s17, 1
        %s177 = sand.u32 %s30, 1
        %s178 = scalar_lea.sflag [#allocation5], %s177
        %s179 = sand.u32 %s30, 1
        %s180 = smul.addr %s179, 8
        %s181 = scalar_lea.vmem [#allocation4], %s180
        // Predicated region
        $region33: #{tpu_custom_call.1} parent=31 // pred_check
          %p182 = pneg %p43
        $region34: #{tpu_custom_call.1} parent=31 // pred_check_branch
          %184 = sbr.rel (%p182) target = $region36
        $region35: #{tpu_custom_call.1} parent=31 // pred_region
          %186 = dma.done %s178, 128
        $region36: #{tpu_custom_call.1} parent=31 // pred_fallthru
          _
        // Predicated region
        $region37: #{tpu_custom_call.1} parent=31 // pred_check
          %p187 = pneg %p64
        $region38: #{tpu_custom_call.1} parent=31 // pred_check_branch
          %189 = sbr.rel (%p187) target = $region40
        $region39: #{tpu_custom_call.1} parent=31 // pred_region
          %191 = dma.done [#allocation7], 16
        $region40: #{tpu_custom_call.1} parent=31 // pred_fallthru
          _
        // Predicated region
        $region41: #{tpu_custom_call.1} parent=31 // pred_check
          %p192 = pneg %p85
        $region42: #{tpu_custom_call.1} parent=31 // pred_check_branch
          %194 = sbr.rel (%p192) target = $region44
        $region43: #{tpu_custom_call.1} parent=31 // pred_region
          %196 = dma.done [#allocation8], 16
        $region44: #{tpu_custom_call.1} parent=31 // pred_fallthru
          _
        %197 = sfence
        %s198 = sand.u32 %s30, 1
        %s199 = scalar_lea.sflag [#allocation5], %s198
        %s200 = sand.u32 %s30, 1
        %s201 = smul.addr %s200, 8
        %s202 = scalar_lea.vmem [#allocation4], %s201
        %p203 = pneg %p43
        %p204 = pneg %p40
        %p205 = pneg %p64
        %p206 = pneg %p61
        %p207 = pneg %p85
        %p208 = pneg %p82
        %p209 = pneg %p111
        %p210 = pneg %p108
        %s211 = sand.u32 %s98, 1
        %s212 = scalar_lea.sflag [#allocation6], %s211
        %s213 = sand.u32 %s98, 1
        %s214 = smul.addr %s213, 8
        %s215 = scalar_lea.vmem [#allocation11], %s214
        %s216 = sld [smem:[#allocation9]]
        %s217 = sld [smem:[#allocation9 + $0x1]]
        %s218 = sld [smem:[#allocation9 + $0x2]]
        %s219 = sld [smem:[#allocation9 + $0x3]]
        %s220 = sld [smem:[#allocation9 + $0x4]]
        %s221 = sld [smem:[#allocation9 + $0x5]]
        %s222 = sld [smem:[#allocation9 + $0x6]]
        %s223 = sld [smem:[#allocation9 + $0x7]]
        %s224 = sld [smem:[#allocation9 + $0x8]]
        %s225 = sld [smem:[#allocation9 + $0x9]]
        %s226 = sld [smem:[#allocation9 + $0xa]]
        %s227 = sld [smem:[#allocation9 + $0xb]]
        %s228 = sld [smem:[#allocation9 + $0xc]]
        %s229 = sld [smem:[#allocation9 + $0xd]]
        %s230 = sld [smem:[#allocation9 + $0xe]]
        %s231 = sld [smem:[#allocation9 + $0xf]]
        %s232 = sld [smem:[#allocation9 + $0x10]]
        %s233 = sld [smem:[#allocation9 + $0x11]]
        %s234 = sld [smem:[#allocation9 + $0x12]]
        %s235 = sld [smem:[#allocation9 + $0x13]]
        %s236 = sld [smem:[#allocation9 + $0x14]]
        %s237 = sld [smem:[#allocation9 + $0x15]]
        %s238 = sld [smem:[#allocation9 + $0x16]]
        %s239 = sld [smem:[#allocation9 + $0x17]]
        %s240 = sld [smem:[#allocation9 + $0x18]]
        %s241 = sld [smem:[#allocation9 + $0x19]]
        %s242 = sld [smem:[#allocation9 + $0x1a]]
        %s243 = sld [smem:[#allocation9 + $0x1b]]
        %s244 = sld [smem:[#allocation9 + $0x1c]]
        %s245 = sld [smem:[#allocation9 + $0x1d]]
        %s246 = sld [smem:[#allocation9 + $0x1e]]
        %s247 = sld [smem:[#allocation9 + $0x1f]]
        %s248 = sld [smem:[#allocation9 + $0x20]]
        %s249 = sld [smem:[#allocation9 + $0x21]]
        %s250 = sld [smem:[#allocation9 + $0x22]]
        %s251 = sld [smem:[#allocation9 + $0x23]]
        %s252 = sld [smem:[#allocation9 + $0x24]]
        %s253 = sld [smem:[#allocation9 + $0x25]]
        %s254 = sld [smem:[#allocation9 + $0x26]]
        %s255 = sld [smem:[#allocation9 + $0x27]]
        %s256 = sld [smem:[#allocation9 + $0x28]]
        %s257 = sld [smem:[#allocation9 + $0x29]]
        %s258 = sld [smem:[#allocation9 + $0x2a]]
        %s259 = sld [smem:[#allocation9 + $0x2b]]
        %s260 = sld [smem:[#allocation9 + $0x2c]]
        %s261 = sld [smem:[#allocation9 + $0x2d]]
        %s262 = sld [smem:[#allocation9 + $0x2e]]
        %s263 = sld [smem:[#allocation9 + $0x2f]]
        %s264 = sld [smem:[#allocation9 + $0x30]]
        %s265 = sld [smem:[#allocation9 + $0x31]]
        %s266 = sld [smem:[#allocation9 + $0x32]]
        %s267 = sld [smem:[#allocation9 + $0x33]]
        %s268 = sld [smem:[#allocation9 + $0x34]]
        %s269 = sld [smem:[#allocation9 + $0x35]]
        %s270 = sld [smem:[#allocation9 + $0x36]]
        %s271 = sld [smem:[#allocation9 + $0x37]]
        %s272 = sld [smem:[#allocation9 + $0x38]]
        %s273 = sld [smem:[#allocation9 + $0x39]]
        %s274 = sld [smem:[#allocation9 + $0x3a]]
        %s275 = sld [smem:[#allocation9 + $0x3b]]
        %s276 = sld [smem:[#allocation9 + $0x3c]]
        %s277 = sld [smem:[#allocation9 + $0x3d]]
        %s278 = sld [smem:[#allocation9 + $0x3e]]
        %s279 = sld [smem:[#allocation9 + $0x3f]]
        %s280 = sld [smem:[#allocation9 + $0x40]]
        %s281 = sld [smem:[#allocation9 + $0x41]]
        %s282 = sld [smem:[#allocation9 + $0x42]]
        %s283 = sld [smem:[#allocation9 + $0x43]]
        %s284 = sld [smem:[#allocation9 + $0x44]]
        %s285 = sld [smem:[#allocation9 + $0x45]]
        %s286 = sld [smem:[#allocation9 + $0x46]]
        %s287 = sld [smem:[#allocation9 + $0x47]]
        %s288 = sld [smem:[#allocation9 + $0x48]]
        %s289 = sld [smem:[#allocation9 + $0x49]]
        %s290 = sld [smem:[#allocation9 + $0x4a]]
        %s291 = sld [smem:[#allocation9 + $0x4b]]
        %s292 = sld [smem:[#allocation9 + $0x4c]]
        %s293 = sld [smem:[#allocation9 + $0x4d]]
        %s294 = sld [smem:[#allocation9 + $0x4e]]
        %s295 = sld [smem:[#allocation9 + $0x4f]]
        %s296 = sld [smem:[#allocation9 + $0x50]]
        %s297 = sld [smem:[#allocation9 + $0x51]]
        %s298 = sld [smem:[#allocation9 + $0x52]]
        %s299 = sld [smem:[#allocation9 + $0x53]]
        %s300 = sld [smem:[#allocation9 + $0x54]]
        %s301 = sld [smem:[#allocation9 + $0x55]]
        %s302 = sld [smem:[#allocation9 + $0x56]]
        %s303 = sld [smem:[#allocation9 + $0x57]]
        %s304 = sld [smem:[#allocation9 + $0x58]]
        %s305 = sld [smem:[#allocation9 + $0x59]]
        %s306 = sld [smem:[#allocation9 + $0x5a]]
        %s307 = sld [smem:[#allocation9 + $0x5b]]
        %s308 = sld [smem:[#allocation9 + $0x5c]]
        %s309 = sld [smem:[#allocation9 + $0x5d]]
        %s310 = sld [smem:[#allocation9 + $0x5e]]
        %s311 = sld [smem:[#allocation9 + $0x5f]]
        %s312 = sld [smem:[#allocation9 + $0x60]]
        %s313 = sld [smem:[#allocation9 + $0x61]]
        %s314 = sld [smem:[#allocation10]]
        %s315 = sld [smem:[#allocation10 + $0x1]]
        %316 = vst [vmem:[#allocation2] sm:$0xff] 0.0
        %317 = vst [vmem:[#allocation2 + $0x8] sm:$0xff] 0.0
        %318 = vst [vmem:[#allocation2 + $0x10] sm:$0x3f] 0.0
        %319 = vst [vmem:[#allocation2 + $0x18] sm:$0xff] 0.0
        %320 = vst [vmem:[#allocation2 + $0x20] sm:$0xff] 0.0
        %321 = vst [vmem:[#allocation2 + $0x28] sm:$0x3f] 0.0
        %v322 = vld [vmem:[%s181] sm:$0xff]
        %324 = vst [vmem:[#allocation1] ss:$2 sm:$0xff] %v322
        %v325 = vld.sshfl [vmem:[#allocation1] sm:$0xff pattern:$0x75316420]
        %v326 = vld.sshfl [vmem:[#allocation1 + $0x8] sm:$0xff pattern:$0x75316420]
        %vm329 = vcmask 1043456
        %v330 = vsel %vm329, %v325, -inf
        %v331 = vrot.slane %v330, 4
        %v332 = vmax.f32 %v330, %v331
        %v333 = vrot.slane %v332, 2
        %v334 = vmax.f32 %v332, %v333
        %v335 = vrot.slane %v334, 1
        %v336 = vmax.f32 %v334, %v335
        %v337 = vsel %vm329, %v326, -inf
        %v338 = vrot.slane %v337, 4
        %v339 = vmax.f32 %v337, %v338
        %v340 = vrot.slane %v339, 2
        %v341 = vmax.f32 %v339, %v340
        %v342 = vrot.slane %v341, 1
        %v343 = vmax.f32 %v341, %v342
        %344 = vst [vmem:[#allocation1] ss:$2 sm:$0xff] %v322
        %v345 = vld.sshfl [vmem:[#allocation1] sm:$0xff pattern:$0x75316420]
        %v346 = vld.sshfl [vmem:[#allocation1 + $0x8] sm:$0xff pattern:$0x75316420]
        %v349 = vsel %vm329, %v345, 0.0
        %v350 = vrot.slane %v349, 4
        %v351 = vadd.f32 %v349, %v350
        %v352 = vrot.slane %v351, 2
        %v353 = vadd.f32 %v351, %v352
        %v354 = vrot.slane %v353, 1
        %v355 = vadd.f32 %v353, %v354
        %v356 = vsel %vm329, %v346, 0.0
        %v357 = vrot.slane %v356, 4
        %v358 = vadd.f32 %v356, %v357
        %v359 = vrot.slane %v358, 2
        %v360 = vadd.f32 %v358, %v359
        %v361 = vrot.slane %v360, 1
        %v362 = vadd.f32 %v360, %v361
        %v363 = vmul.f32 %v355, 0.25
        %v364 = vmul.f32 %v362, 0.25
        %366 = vrot.lane.b32.xlu0 %v336, 3
        %v367 = vpop.permute.xlu0 %366
        %vm369 = vcmask 147480
        %370 = vst.msk [vmem:[#allocation2 + $0x3] sm:$0x1] %vm369, %v367
        %372 = vrot.lane.b32.xlu0 %v363, 3
        %v373 = vpop.permute.xlu0 %372
        %s375 = scalar_lea.vmem [#allocation2], 24
        %376 = vst.msk [vmem:[%s375 + $0x3] sm:$0x1] %vm369, %v373
        %377 = vrot.lane.b32.xlu0 %v336, 115
        %v378 = vpop.permute.xlu0 %377
        %380 = vst.msk [vmem:[#allocation2 + $0x4] sm:$0x1] %vm369, %v378
        %381 = vrot.lane.b32.xlu0 %v363, 115
        %v382 = vpop.permute.xlu0 %381
        %384 = vst.msk [vmem:[%s375 + $0x4] sm:$0x1] %vm369, %v382
        %385 = vrot.lane.b32.xlu0 %v336, 99
        %v386 = vpop.permute.xlu0 %385
        %388 = vst.msk [vmem:[#allocation2 + $0x5] sm:$0x1] %vm369, %v386
        %389 = vrot.lane.b32.xlu0 %v363, 99
        %v390 = vpop.permute.xlu0 %389
        %392 = vst.msk [vmem:[%s375 + $0x5] sm:$0x1] %vm369, %v390
        %393 = vrot.lane.b32.xlu0 %v336, 83
        %v394 = vpop.permute.xlu0 %393
        %396 = vst.msk [vmem:[#allocation2 + $0x6] sm:$0x1] %vm369, %v394
        %397 = vrot.lane.b32.xlu0 %v363, 83
        %v398 = vpop.permute.xlu0 %397
        %400 = vst.msk [vmem:[%s375 + $0x6] sm:$0x1] %vm369, %v398
        %401 = vrot.lane.b32.xlu0 %v336, 67
        %v402 = vpop.permute.xlu0 %401
        %404 = vst.msk [vmem:[#allocation2 + $0x7] sm:$0x1] %vm369, %v402
        %405 = vrot.lane.b32.xlu0 %v363, 67
        %v406 = vpop.permute.xlu0 %405
        %408 = vst.msk [vmem:[%s375 + $0x7] sm:$0x1] %vm369, %v406
        %409 = vrot.lane.b32.xlu0 %v336, 51
        %v410 = vpop.permute.xlu0 %409
        %412 = vst.msk [vmem:[#allocation2 + $0x8] sm:$0x1] %vm369, %v410
        %413 = vrot.lane.b32.xlu0 %v363, 51
        %v414 = vpop.permute.xlu0 %413
        %416 = vst.msk [vmem:[%s375 + $0x8] sm:$0x1] %vm369, %v414
        %417 = vrot.lane.b32.xlu0 %v336, 35
        %v418 = vpop.permute.xlu0 %417
        %420 = vst.msk [vmem:[#allocation2 + $0x9] sm:$0x1] %vm369, %v418
        %421 = vrot.lane.b32.xlu0 %v363, 35
        %v422 = vpop.permute.xlu0 %421
        %424 = vst.msk [vmem:[%s375 + $0x9] sm:$0x1] %vm369, %v422
        %425 = vrot.lane.b32.xlu0 %v336, 19
        %v426 = vpop.permute.xlu0 %425
        %428 = vst.msk [vmem:[#allocation2 + $0xa] sm:$0x1] %vm369, %v426
        %429 = vrot.lane.b32.xlu0 %v363, 19
        %v430 = vpop.permute.xlu0 %429
        %432 = vst.msk [vmem:[%s375 + $0xa] sm:$0x1] %vm369, %v430
        %434 = vrot.lane.b32.xlu0 %v343, 3
        %v435 = vpop.permute.xlu0 %434
        %437 = vst.msk [vmem:[#allocation2 + $0xb] sm:$0x1] %vm369, %v435
        %439 = vrot.lane.b32.xlu0 %v364, 3
        %v440 = vpop.permute.xlu0 %439
        %442 = vst.msk [vmem:[%s375 + $0xb] sm:$0x1] %vm369, %v440
        %443 = vrot.lane.b32.xlu0 %v343, 115
        %v444 = vpop.permute.xlu0 %443
        %446 = vst.msk [vmem:[#allocation2 + $0xc] sm:$0x1] %vm369, %v444
        %447 = vrot.lane.b32.xlu0 %v364, 115
        %v448 = vpop.permute.xlu0 %447
        %450 = vst.msk [vmem:[%s375 + $0xc] sm:$0x1] %vm369, %v448
        %451 = vrot.lane.b32.xlu0 %v343, 99
        %v452 = vpop.permute.xlu0 %451
        %454 = vst.msk [vmem:[#allocation2 + $0xd] sm:$0x1] %vm369, %v452
        %455 = vrot.lane.b32.xlu0 %v364, 99
        %v456 = vpop.permute.xlu0 %455
        %458 = vst.msk [vmem:[%s375 + $0xd] sm:$0x1] %vm369, %v456
        %459 = vrot.lane.b32.xlu0 %v343, 83
        %v460 = vpop.permute.xlu0 %459
        %462 = vst.msk [vmem:[#allocation2 + $0xe] sm:$0x1] %vm369, %v460
        %463 = vrot.lane.b32.xlu0 %v364, 83
        %v464 = vpop.permute.xlu0 %463
        %466 = vst.msk [vmem:[%s375 + $0xe] sm:$0x1] %vm369, %v464
        %467 = vrot.lane.b32.xlu0 %v343, 67
        %v468 = vpop.permute.xlu0 %467
        %470 = vst.msk [vmem:[#allocation2 + $0xf] sm:$0x1] %vm369, %v468
        %471 = vrot.lane.b32.xlu0 %v364, 67
        %v472 = vpop.permute.xlu0 %471
        %474 = vst.msk [vmem:[%s375 + $0xf] sm:$0x1] %vm369, %v472
        %475 = vrot.lane.b32.xlu0 %v343, 51
        %v476 = vpop.permute.xlu0 %475
        %478 = vst.msk [vmem:[#allocation2 + $0x10] sm:$0x1] %vm369, %v476
        %479 = vrot.lane.b32.xlu0 %v364, 51
        %v480 = vpop.permute.xlu0 %479
        %482 = vst.msk [vmem:[%s375 + $0x10] sm:$0x1] %vm369, %v480
        %483 = vrot.lane.b32.xlu0 %v343, 35
        %v484 = vpop.permute.xlu0 %483
        %486 = vst.msk [vmem:[#allocation2 + $0x11] sm:$0x1] %vm369, %v484
        %487 = vrot.lane.b32.xlu0 %v364, 35
        %v488 = vpop.permute.xlu0 %487
        %490 = vst.msk [vmem:[%s375 + $0x11] sm:$0x1] %vm369, %v488
        %491 = vrot.lane.b32.xlu0 %v343, 19
        %v492 = vpop.permute.xlu0 %491
        %494 = vst.msk [vmem:[#allocation2 + $0x12] sm:$0x1] %vm369, %v492
        %495 = vrot.lane.b32.xlu0 %v364, 19
        %v496 = vpop.permute.xlu0 %495
        %498 = vst.msk [vmem:[%s375 + $0x12] sm:$0x1] %vm369, %v496
        %v499 = vld [vmem:[#allocation2] sm:$0xff]
        %v500 = vld [vmem:[#allocation2 + $0x8] sm:$0xff]
        %v501 = vstv %s216
        %v502 = vmul.f32 %v501, %v499
        %v503 = vmul.f32 %v501, %v500
        %v504 = vstv %s217
        %v505 = vmul.f32 %v504, %v499
        %v506 = vmul.f32 %v504, %v500
        %v507 = vstv %s218
        %v508 = vmul.f32 %v507, %v499
        %v509 = vmul.f32 %v507, %v500
        %v510 = vstv %s219
        %v511 = vmul.f32 %v510, %v499
        %v512 = vmul.f32 %v510, %v500
        %v513 = vstv %s220
        %v514 = vmul.f32 %v513, %v499
        %v515 = vmul.f32 %v513, %v500
        %v516 = vstv %s221
        %v517 = vmul.f32 %v516, %v499
        %v518 = vmul.f32 %v516, %v500
        %v519 = vstv %s222
        %v520 = vmul.f32 %v519, %v499
        %v521 = vmul.f32 %v519, %v500
        %v522 = vld [vmem:[#allocation2 + $0x1] sm:$0xff]
        %v523 = vld [vmem:[#allocation2 + $0x9] sm:$0xff]
        %v524 = vstv %s223
        %v525 = vmul.f32 %v524, %v522
        %v526 = vmul.f32 %v524, %v523
        %v527 = vadd.f32 %v502, %v525
        %v528 = vadd.f32 %v503, %v526
        %v529 = vstv %s224
        %v530 = vmul.f32 %v529, %v522
        %v531 = vmul.f32 %v529, %v523
        %v532 = vadd.f32 %v505, %v530
        %v533 = vadd.f32 %v506, %v531
        %v534 = vstv %s225
        %v535 = vmul.f32 %v534, %v522
        %v536 = vmul.f32 %v534, %v523
        %v537 = vadd.f32 %v508, %v535
        %v538 = vadd.f32 %v509, %v536
        %v539 = vstv %s226
        %v540 = vmul.f32 %v539, %v522
        %v541 = vmul.f32 %v539, %v523
        %v542 = vadd.f32 %v511, %v540
        %v543 = vadd.f32 %v512, %v541
        %v544 = vstv %s227
        %v545 = vmul.f32 %v544, %v522
        %v546 = vmul.f32 %v544, %v523
        %v547 = vadd.f32 %v514, %v545
        %v548 = vadd.f32 %v515, %v546
        %v549 = vstv %s228
        %v550 = vmul.f32 %v549, %v522
        %v551 = vmul.f32 %v549, %v523
        %v552 = vadd.f32 %v517, %v550
        %v553 = vadd.f32 %v518, %v551
        %v554 = vstv %s229
        %v555 = vmul.f32 %v554, %v522
        %v556 = vmul.f32 %v554, %v523
        %v557 = vadd.f32 %v520, %v555
        %v558 = vadd.f32 %v521, %v556
        %v559 = vld [vmem:[#allocation2 + $0x2] sm:$0xff]
        %v560 = vld [vmem:[#allocation2 + $0xa] sm:$0xff]
        %v561 = vstv %s230
        %v562 = vmul.f32 %v561, %v559
        %v563 = vmul.f32 %v561, %v560
        %v564 = vadd.f32 %v527, %v562
        %v565 = vadd.f32 %v528, %v563
        %v566 = vstv %s231
        %v567 = vmul.f32 %v566, %v559
        %v568 = vmul.f32 %v566, %v560
        %v569 = vadd.f32 %v532, %v567
        %v570 = vadd.f32 %v533, %v568
        %v571 = vstv %s232
        %v572 = vmul.f32 %v571, %v559
        %v573 = vmul.f32 %v571, %v560
        %v574 = vadd.f32 %v537, %v572
        %v575 = vadd.f32 %v538, %v573
        %v576 = vstv %s233
        %v577 = vmul.f32 %v576, %v559
        %v578 = vmul.f32 %v576, %v560
        %v579 = vadd.f32 %v542, %v577
        %v580 = vadd.f32 %v543, %v578
        %v581 = vstv %s234
        %v582 = vmul.f32 %v581, %v559
        %v583 = vmul.f32 %v581, %v560
        %v584 = vadd.f32 %v547, %v582
        %v585 = vadd.f32 %v548, %v583
        %v586 = vstv %s235
        %v587 = vmul.f32 %v586, %v559
        %v588 = vmul.f32 %v586, %v560
        %v589 = vadd.f32 %v552, %v587
        %v590 = vadd.f32 %v553, %v588
        %v591 = vstv %s236
        %v592 = vmul.f32 %v591, %v559
        %v593 = vmul.f32 %v591, %v560
        %v594 = vadd.f32 %v557, %v592
        %v595 = vadd.f32 %v558, %v593
        %v596 = vld [vmem:[#allocation2 + $0x3] sm:$0xff]
        %v597 = vld [vmem:[#allocation2 + $0xb] sm:$0xff]
        %v598 = vstv %s237
        %v599 = vmul.f32 %v598, %v596
        %v600 = vmul.f32 %v598, %v597
        %v601 = vadd.f32 %v564, %v599
        %v602 = vadd.f32 %v565, %v600
        %v603 = vstv %s238
        %v604 = vmul.f32 %v603, %v596
        %v605 = vmul.f32 %v603, %v597
        %v606 = vadd.f32 %v569, %v604
        %v607 = vadd.f32 %v570, %v605
        %v608 = vstv %s239
        %v609 = vmul.f32 %v608, %v596
        %v610 = vmul.f32 %v608, %v597
        %v611 = vadd.f32 %v574, %v609
        %v612 = vadd.f32 %v575, %v610
        %v613 = vstv %s240
        %v614 = vmul.f32 %v613, %v596
        %v615 = vmul.f32 %v613, %v597
        %v616 = vadd.f32 %v579, %v614
        %v617 = vadd.f32 %v580, %v615
        %v618 = vstv %s241
        %v619 = vmul.f32 %v618, %v596
        %v620 = vmul.f32 %v618, %v597
        %v621 = vadd.f32 %v584, %v619
        %v622 = vadd.f32 %v585, %v620
        %v623 = vstv %s242
        %v624 = vmul.f32 %v623, %v596
        %v625 = vmul.f32 %v623, %v597
        %v626 = vadd.f32 %v589, %v624
        %v627 = vadd.f32 %v590, %v625
        %v628 = vstv %s243
        %v629 = vmul.f32 %v628, %v596
        %v630 = vmul.f32 %v628, %v597
        %v631 = vadd.f32 %v594, %v629
        %v632 = vadd.f32 %v595, %v630
        %v633 = vld [vmem:[#allocation2 + $0x4] sm:$0xff]
        %v634 = vld [vmem:[#allocation2 + $0xc] sm:$0xff]
        %v635 = vstv %s244
        %v636 = vmul.f32 %v635, %v633
        %v637 = vmul.f32 %v635, %v634
        %v638 = vadd.f32 %v601, %v636
        %v639 = vadd.f32 %v602, %v637
        %v640 = vstv %s245
        %v641 = vmul.f32 %v640, %v633
        %v642 = vmul.f32 %v640, %v634
        %v643 = vadd.f32 %v606, %v641
        %v644 = vadd.f32 %v607, %v642
        %v645 = vstv %s246
        %v646 = vmul.f32 %v645, %v633
        %v647 = vmul.f32 %v645, %v634
        %v648 = vadd.f32 %v611, %v646
        %v649 = vadd.f32 %v612, %v647
        %v650 = vstv %s247
        %v651 = vmul.f32 %v650, %v633
        %v652 = vmul.f32 %v650, %v634
        %v653 = vadd.f32 %v616, %v651
        %v654 = vadd.f32 %v617, %v652
        %v655 = vstv %s248
        %v656 = vmul.f32 %v655, %v633
        %v657 = vmul.f32 %v655, %v634
        %v658 = vadd.f32 %v621, %v656
        %v659 = vadd.f32 %v622, %v657
        %v660 = vstv %s249
        %v661 = vmul.f32 %v660, %v633
        %v662 = vmul.f32 %v660, %v634
        %v663 = vadd.f32 %v626, %v661
        %v664 = vadd.f32 %v627, %v662
        %v665 = vstv %s250
        %v666 = vmul.f32 %v665, %v633
        %v667 = vmul.f32 %v665, %v634
        %v668 = vadd.f32 %v631, %v666
        %v669 = vadd.f32 %v632, %v667
        %v670 = vld [vmem:[#allocation2 + $0x5] sm:$0xff]
        %v671 = vld [vmem:[#allocation2 + $0xd] sm:$0xff]
        %v672 = vstv %s251
        %v673 = vmul.f32 %v672, %v670
        %v674 = vmul.f32 %v672, %v671
        %v675 = vadd.f32 %v638, %v673
        %v676 = vadd.f32 %v639, %v674
        %v677 = vstv %s252
        %v678 = vmul.f32 %v677, %v670
        %v679 = vmul.f32 %v677, %v671
        %v680 = vadd.f32 %v643, %v678
        %v681 = vadd.f32 %v644, %v679
        %v682 = vstv %s253
        %v683 = vmul.f32 %v682, %v670
        %v684 = vmul.f32 %v682, %v671
        %v685 = vadd.f32 %v648, %v683
        %v686 = vadd.f32 %v649, %v684
        %v687 = vstv %s254
        %v688 = vmul.f32 %v687, %v670
        %v689 = vmul.f32 %v687, %v671
        %v690 = vadd.f32 %v653, %v688
        %v691 = vadd.f32 %v654, %v689
        %v692 = vstv %s255
        %v693 = vmul.f32 %v692, %v670
        %v694 = vmul.f32 %v692, %v671
        %v695 = vadd.f32 %v658, %v693
        %v696 = vadd.f32 %v659, %v694
        %v697 = vstv %s256
        %v698 = vmul.f32 %v697, %v670
        %v699 = vmul.f32 %v697, %v671
        %v700 = vadd.f32 %v663, %v698
        %v701 = vadd.f32 %v664, %v699
        %v702 = vstv %s257
        %v703 = vmul.f32 %v702, %v670
        %v704 = vmul.f32 %v702, %v671
        %v705 = vadd.f32 %v668, %v703
        %v706 = vadd.f32 %v669, %v704
        %v707 = vld [vmem:[#allocation2 + $0x6] sm:$0xff]
        %v708 = vld [vmem:[#allocation2 + $0xe] sm:$0xff]
        %v709 = vstv %s258
        %v710 = vmul.f32 %v709, %v707
        %v711 = vmul.f32 %v709, %v708
        %v712 = vadd.f32 %v675, %v710
        %v713 = vadd.f32 %v676, %v711
        %v714 = vstv %s259
        %v715 = vmul.f32 %v714, %v707
        %v716 = vmul.f32 %v714, %v708
        %v717 = vadd.f32 %v680, %v715
        %v718 = vadd.f32 %v681, %v716
        %v719 = vstv %s260
        %v720 = vmul.f32 %v719, %v707
        %v721 = vmul.f32 %v719, %v708
        %v722 = vadd.f32 %v685, %v720
        %v723 = vadd.f32 %v686, %v721
        %v724 = vstv %s261
        %v725 = vmul.f32 %v724, %v707
        %v726 = vmul.f32 %v724, %v708
        %v727 = vadd.f32 %v690, %v725
        %v728 = vadd.f32 %v691, %v726
        %v729 = vstv %s262
        %v730 = vmul.f32 %v729, %v707
        %v731 = vmul.f32 %v729, %v708
        %v732 = vadd.f32 %v695, %v730
        %v733 = vadd.f32 %v696, %v731
        %v734 = vstv %s263
        %v735 = vmul.f32 %v734, %v707
        %v736 = vmul.f32 %v734, %v708
        %v737 = vadd.f32 %v700, %v735
        %v738 = vadd.f32 %v701, %v736
        %v739 = vstv %s264
        %v740 = vmul.f32 %v739, %v707
        %v741 = vmul.f32 %v739, %v708
        %v742 = vadd.f32 %v705, %v740
        %v743 = vadd.f32 %v706, %v741
        %v744 = vld [vmem:[%s375] sm:$0xff]
        %v745 = vld [vmem:[%s375 + $0x8] sm:$0xff]
        %v746 = vstv %s265
        %v747 = vmul.f32 %v746, %v744
        %v748 = vmul.f32 %v746, %v745
        %v749 = vadd.f32 %v712, %v747
        %v750 = vadd.f32 %v713, %v748
        %v751 = vstv %s266
        %v752 = vmul.f32 %v751, %v744
        %v753 = vmul.f32 %v751, %v745
        %v754 = vadd.f32 %v717, %v752
        %v755 = vadd.f32 %v718, %v753
        %v756 = vstv %s267
        %v757 = vmul.f32 %v756, %v744
        %v758 = vmul.f32 %v756, %v745
        %v759 = vadd.f32 %v722, %v757
        %v760 = vadd.f32 %v723, %v758
        %v761 = vstv %s268
        %v762 = vmul.f32 %v761, %v744
        %v763 = vmul.f32 %v761, %v745
        %v764 = vadd.f32 %v727, %v762
        %v765 = vadd.f32 %v728, %v763
        %v766 = vstv %s269
        %v767 = vmul.f32 %v766, %v744
        %v768 = vmul.f32 %v766, %v745
        %v769 = vadd.f32 %v732, %v767
        %v770 = vadd.f32 %v733, %v768
        %v771 = vstv %s270
        %v772 = vmul.f32 %v771, %v744
        %v773 = vmul.f32 %v771, %v745
        %v774 = vadd.f32 %v737, %v772
        %v775 = vadd.f32 %v738, %v773
        %v776 = vstv %s271
        %v777 = vmul.f32 %v776, %v744
        %v778 = vmul.f32 %v776, %v745
        %v779 = vadd.f32 %v742, %v777
        %v780 = vadd.f32 %v743, %v778
        %v781 = vld [vmem:[%s375 + $0x1] sm:$0xff]
        %v782 = vld [vmem:[%s375 + $0x9] sm:$0xff]
        %v783 = vstv %s272
        %v784 = vmul.f32 %v783, %v781
        %v785 = vmul.f32 %v783, %v782
        %v786 = vadd.f32 %v749, %v784
        %v787 = vadd.f32 %v750, %v785
        %v788 = vstv %s273
        %v789 = vmul.f32 %v788, %v781
        %v790 = vmul.f32 %v788, %v782
        %v791 = vadd.f32 %v754, %v789
        %v792 = vadd.f32 %v755, %v790
        %v793 = vstv %s274
        %v794 = vmul.f32 %v793, %v781
        %v795 = vmul.f32 %v793, %v782
        %v796 = vadd.f32 %v759, %v794
        %v797 = vadd.f32 %v760, %v795
        %v798 = vstv %s275
        %v799 = vmul.f32 %v798, %v781
        %v800 = vmul.f32 %v798, %v782
        %v801 = vadd.f32 %v764, %v799
        %v802 = vadd.f32 %v765, %v800
        %v803 = vstv %s276
        %v804 = vmul.f32 %v803, %v781
        %v805 = vmul.f32 %v803, %v782
        %v806 = vadd.f32 %v769, %v804
        %v807 = vadd.f32 %v770, %v805
        %v808 = vstv %s277
        %v809 = vmul.f32 %v808, %v781
        %v810 = vmul.f32 %v808, %v782
        %v811 = vadd.f32 %v774, %v809
        %v812 = vadd.f32 %v775, %v810
        %v813 = vstv %s278
        %v814 = vmul.f32 %v813, %v781
        %v815 = vmul.f32 %v813, %v782
        %v816 = vadd.f32 %v779, %v814
        %v817 = vadd.f32 %v780, %v815
        %v818 = vld [vmem:[%s375 + $0x2] sm:$0xff]
        %v819 = vld [vmem:[%s375 + $0xa] sm:$0xff]
        %v820 = vstv %s279
        %v821 = vmul.f32 %v820, %v818
        %v822 = vmul.f32 %v820, %v819
        %v823 = vadd.f32 %v786, %v821
        %v824 = vadd.f32 %v787, %v822
        %v825 = vstv %s280
        %v826 = vmul.f32 %v825, %v818
        %v827 = vmul.f32 %v825, %v819
        %v828 = vadd.f32 %v791, %v826
        %v829 = vadd.f32 %v792, %v827
        %v830 = vstv %s281
        %v831 = vmul.f32 %v830, %v818
        %v832 = vmul.f32 %v830, %v819
        %v833 = vadd.f32 %v796, %v831
        %v834 = vadd.f32 %v797, %v832
        %v835 = vstv %s282
        %v836 = vmul.f32 %v835, %v818
        %v837 = vmul.f32 %v835, %v819
        %v838 = vadd.f32 %v801, %v836
        %v839 = vadd.f32 %v802, %v837
        %v840 = vstv %s283
        %v841 = vmul.f32 %v840, %v818
        %v842 = vmul.f32 %v840, %v819
        %v843 = vadd.f32 %v806, %v841
        %v844 = vadd.f32 %v807, %v842
        %v845 = vstv %s284
        %v846 = vmul.f32 %v845, %v818
        %v847 = vmul.f32 %v845, %v819
        %v848 = vadd.f32 %v811, %v846
        %v849 = vadd.f32 %v812, %v847
        %v850 = vstv %s285
        %v851 = vmul.f32 %v850, %v818
        %v852 = vmul.f32 %v850, %v819
        %v853 = vadd.f32 %v816, %v851
        %v854 = vadd.f32 %v817, %v852
        %v855 = vld [vmem:[%s375 + $0x3] sm:$0xff]
        %v856 = vld [vmem:[%s375 + $0xb] sm:$0xff]
        %v857 = vstv %s286
        %v858 = vmul.f32 %v857, %v855
        %v859 = vmul.f32 %v857, %v856
        %v860 = vadd.f32 %v823, %v858
        %v861 = vadd.f32 %v824, %v859
        %v862 = vstv %s287
        %v863 = vmul.f32 %v862, %v855
        %v864 = vmul.f32 %v862, %v856
        %v865 = vadd.f32 %v828, %v863
        %v866 = vadd.f32 %v829, %v864
        %v867 = vstv %s288
        %v868 = vmul.f32 %v867, %v855
        %v869 = vmul.f32 %v867, %v856
        %v870 = vadd.f32 %v833, %v868
        %v871 = vadd.f32 %v834, %v869
        %v872 = vstv %s289
        %v873 = vmul.f32 %v872, %v855
        %v874 = vmul.f32 %v872, %v856
        %v875 = vadd.f32 %v838, %v873
        %v876 = vadd.f32 %v839, %v874
        %v877 = vstv %s290
        %v878 = vmul.f32 %v877, %v855
        %v879 = vmul.f32 %v877, %v856
        %v880 = vadd.f32 %v843, %v878
        %v881 = vadd.f32 %v844, %v879
        %v882 = vstv %s291
        %v883 = vmul.f32 %v882, %v855
        %v884 = vmul.f32 %v882, %v856
        %v885 = vadd.f32 %v848, %v883
        %v886 = vadd.f32 %v849, %v884
        %v887 = vstv %s292
        %v888 = vmul.f32 %v887, %v855
        %v889 = vmul.f32 %v887, %v856
        %v890 = vadd.f32 %v853, %v888
        %v891 = vadd.f32 %v854, %v889
        %v892 = vld [vmem:[%s375 + $0x4] sm:$0xff]
        %v893 = vld [vmem:[%s375 + $0xc] sm:$0xff]
        %v894 = vstv %s293
        %v895 = vmul.f32 %v894, %v892
        %v896 = vmul.f32 %v894, %v893
        %v897 = vadd.f32 %v860, %v895
        %v898 = vadd.f32 %v861, %v896
        %v899 = vstv %s294
        %v900 = vmul.f32 %v899, %v892
        %v901 = vmul.f32 %v899, %v893
        %v902 = vadd.f32 %v865, %v900
        %v903 = vadd.f32 %v866, %v901
        %v904 = vstv %s295
        %v905 = vmul.f32 %v904, %v892
        %v906 = vmul.f32 %v904, %v893
        %v907 = vadd.f32 %v870, %v905
        %v908 = vadd.f32 %v871, %v906
        %v909 = vstv %s296
        %v910 = vmul.f32 %v909, %v892
        %v911 = vmul.f32 %v909, %v893
        %v912 = vadd.f32 %v875, %v910
        %v913 = vadd.f32 %v876, %v911
        %v914 = vstv %s297
        %v915 = vmul.f32 %v914, %v892
        %v916 = vmul.f32 %v914, %v893
        %v917 = vadd.f32 %v880, %v915
        %v918 = vadd.f32 %v881, %v916
        %v919 = vstv %s298
        %v920 = vmul.f32 %v919, %v892
        %v921 = vmul.f32 %v919, %v893
        %v922 = vadd.f32 %v885, %v920
        %v923 = vadd.f32 %v886, %v921
        %v924 = vstv %s299
        %v925 = vmul.f32 %v924, %v892
        %v926 = vmul.f32 %v924, %v893
        %v927 = vadd.f32 %v890, %v925
        %v928 = vadd.f32 %v891, %v926
        %v929 = vld [vmem:[%s375 + $0x5] sm:$0xff]
        %v930 = vld [vmem:[%s375 + $0xd] sm:$0xff]
        %v931 = vstv %s300
        %v932 = vmul.f32 %v931, %v929
        %v933 = vmul.f32 %v931, %v930
        %v934 = vadd.f32 %v897, %v932
        %v935 = vadd.f32 %v898, %v933
        %v936 = vstv %s301
        %v937 = vmul.f32 %v936, %v929
        %v938 = vmul.f32 %v936, %v930
        %v939 = vadd.f32 %v902, %v937
        %v940 = vadd.f32 %v903, %v938
        %v941 = vstv %s302
        %v942 = vmul.f32 %v941, %v929
        %v943 = vmul.f32 %v941, %v930
        %v944 = vadd.f32 %v907, %v942
        %v945 = vadd.f32 %v908, %v943
        %v946 = vstv %s303
        %v947 = vmul.f32 %v946, %v929
        %v948 = vmul.f32 %v946, %v930
        %v949 = vadd.f32 %v912, %v947
        %v950 = vadd.f32 %v913, %v948
        %v951 = vstv %s304
        %v952 = vmul.f32 %v951, %v929
        %v953 = vmul.f32 %v951, %v930
        %v954 = vadd.f32 %v917, %v952
        %v955 = vadd.f32 %v918, %v953
        %v956 = vstv %s305
        %v957 = vmul.f32 %v956, %v929
        %v958 = vmul.f32 %v956, %v930
        %v959 = vadd.f32 %v922, %v957
        %v960 = vadd.f32 %v923, %v958
        %v961 = vstv %s306
        %v962 = vmul.f32 %v961, %v929
        %v963 = vmul.f32 %v961, %v930
        %v964 = vadd.f32 %v927, %v962
        %v965 = vadd.f32 %v928, %v963
        %v966 = vld [vmem:[%s375 + $0x6] sm:$0xff]
        %v967 = vld [vmem:[%s375 + $0xe] sm:$0xff]
        %v968 = vstv %s307
        %v969 = vmul.f32 %v968, %v966
        %v970 = vmul.f32 %v968, %v967
        %v971 = vadd.f32 %v934, %v969
        %v972 = vadd.f32 %v935, %v970
        %v973 = vstv %s308
        %v974 = vmul.f32 %v973, %v966
        %v975 = vmul.f32 %v973, %v967
        %v976 = vadd.f32 %v939, %v974
        %v977 = vadd.f32 %v940, %v975
        %v978 = vstv %s309
        %v979 = vmul.f32 %v978, %v966
        %v980 = vmul.f32 %v978, %v967
        %v981 = vadd.f32 %v944, %v979
        %v982 = vadd.f32 %v945, %v980
        %v983 = vstv %s310
        %v984 = vmul.f32 %v983, %v966
        %v985 = vmul.f32 %v983, %v967
        %v986 = vadd.f32 %v949, %v984
        %v987 = vadd.f32 %v950, %v985
        %v988 = vstv %s311
        %v989 = vmul.f32 %v988, %v966
        %v990 = vmul.f32 %v988, %v967
        %v991 = vadd.f32 %v954, %v989
        %v992 = vadd.f32 %v955, %v990
        %v993 = vstv %s312
        %v994 = vmul.f32 %v993, %v966
        %v995 = vmul.f32 %v993, %v967
        %v996 = vadd.f32 %v959, %v994
        %v997 = vadd.f32 %v960, %v995
        %v998 = vstv %s313
        %v999 = vmul.f32 %v998, %v966
        %v1000 = vmul.f32 %v998, %v967
        %v1001 = vadd.f32 %v964, %v999
        %v1002 = vadd.f32 %v965, %v1000
        %1003 = vrot.lane.b32.xlu0 %v976, 127
        %v1004 = vpop.permute.xlu0 %1003
        %1005 = vrot.lane.b32.xlu0 %v977, 127
        %v1006 = vpop.permute.xlu0 %1005
        %v1007 = vadd.f32 %v971, %v1004
        %v1008 = vadd.f32 %v972, %v1006
        %1009 = vrot.lane.b32.xlu0 %v981, 126
        %v1010 = vpop.permute.xlu0 %1009
        %1011 = vrot.lane.b32.xlu0 %v982, 126
        %v1012 = vpop.permute.xlu0 %1011
        %v1013 = vadd.f32 %v1007, %v1010
        %v1014 = vadd.f32 %v1008, %v1012
        %1015 = vrot.lane.b32.xlu0 %v986, 125
        %v1016 = vpop.permute.xlu0 %1015
        %1017 = vrot.lane.b32.xlu0 %v987, 125
        %v1018 = vpop.permute.xlu0 %1017
        %v1019 = vadd.f32 %v1013, %v1016
        %v1020 = vadd.f32 %v1014, %v1018
        %1021 = vrot.lane.b32.xlu0 %v991, 124
        %v1022 = vpop.permute.xlu0 %1021
        %1023 = vrot.lane.b32.xlu0 %v992, 124
        %v1024 = vpop.permute.xlu0 %1023
        %v1025 = vadd.f32 %v1019, %v1022
        %v1026 = vadd.f32 %v1020, %v1024
        %1027 = vrot.lane.b32.xlu0 %v996, 123
        %v1028 = vpop.permute.xlu0 %1027
        %1029 = vrot.lane.b32.xlu0 %v997, 123
        %v1030 = vpop.permute.xlu0 %1029
        %v1031 = vadd.f32 %v1025, %v1028
        %v1032 = vadd.f32 %v1026, %v1030
        %1033 = vrot.lane.b32.xlu0 %v1001, 122
        %v1034 = vpop.permute.xlu0 %1033
        %1035 = vrot.lane.b32.xlu0 %v1002, 122
        %v1036 = vpop.permute.xlu0 %1035
        %v1037 = vadd.f32 %v1031, %v1034
        %v1038 = vadd.f32 %v1032, %v1036
        %v1039 = vstv %s314
        %v1040 = vmul.f32 %v1037, %v1039
        %v1041 = vmul.f32 %v1038, %v1039
        %v1042 = vstv %s315
        %v1043 = vadd.f32 %v1040, %v1042
        %v1044 = vadd.f32 %v1041, %v1042
        %v1045 = vxor.u32 %v1043, 2147483648
        %v1046 = vxor.u32 %v1044, 2147483648
        %v1047 = vmul.f32 %v1045, 1.442695
        %v1048 = vpow.pop %v1047
        %v1049 = vmul.f32 %v1046, 1.442695
        %v1050 = vpow.pop %v1049
        %v1051 = vadd.f32 %v1048, 1.0
        %v1052 = vadd.f32 %v1050, 1.0
        %v1053 = vrcp.pop %v1051
        %v1054 = vmul.f32 %v1051, %v1053
        %v1055 = vsub.f32 1.0, %v1054
        %v1056 = vmul.f32 %v1053, %v1055
        %v1057 = vadd.f32 %v1053, %v1056
        %vm1058 = vweird.f32 %v1051
        %vm1059 = vweird.f32 %v1053
        %vm1060 = vmor %vm1058, %vm1059
        %v1061 = vsel %vm1060, %v1053, %v1057
        %v1062 = vand.u32 2147483647, %v1051
        %vm1063 = vcmp.eq.f32.partialorder %v1062, 8.507059e+37
        %v1064 = vand.u32 %v1051, 2147483648
        %v1065 = vor.u32 1.1754944e-38, %v1064
        %v1066 = vsel %vm1063, %v1065, %v1061
        %v1067 = vmul.f32 1.0, %v1066
        %v1068 = vrcp.pop %v1052
        %v1069 = vmul.f32 %v1052, %v1068
        %v1070 = vsub.f32 1.0, %v1069
        %v1071 = vmul.f32 %v1068, %v1070
        %v1072 = vadd.f32 %v1068, %v1071
        %vm1073 = vweird.f32 %v1052
        %vm1074 = vweird.f32 %v1068
        %vm1075 = vmor %vm1073, %vm1074
        %v1076 = vsel %vm1075, %v1068, %v1072
        %v1077 = vand.u32 2147483647, %v1052
        %vm1078 = vcmp.eq.f32.partialorder %v1077, 8.507059e+37
        %v1079 = vand.u32 %v1052, 2147483648
        %v1080 = vor.u32 1.1754944e-38, %v1079
        %v1081 = vsel %vm1078, %v1080, %v1076
        %v1082 = vmul.f32 1.0, %v1081
        %v1083 = vlaneseq
        %vm1084 = vcmp.ge.s32.totalorder %v1083, 0
        %vm1085 = vcmp.lt.s32.totalorder %v1083, 16
        %vm1086 = vmand %vm1084, %vm1085
        %1087 = vst.msk [vmem:[#allocation3] sm:$0x1] %vm1086, %v1067
        %1089 = vst [vmem:[#allocation1] sm:$0xff] %v1067
        %s1090 = scalar_lea.vmem [#allocation1], 1
        %v1091 = vld [vmem:[%s1090] ss:$9 sm:$0xff]
        %1092 = vrot.lane.b32.xlu0 %v1091, 16
        %v1093 = vpop.permute.xlu0 %1092
        %vm1095 = vcmp.ge.s32.totalorder %v1083, 16
        %vm1096 = vcmp.lt.s32.totalorder %v1083, 32
        %vm1097 = vmand %vm1095, %vm1096
        %1098 = vst.msk [vmem:[#allocation3] sm:$0x1] %vm1097, %v1093
        %1099 = vst [vmem:[#allocation1] sm:$0xff] %v1067
        %s1100 = scalar_lea.vmem [#allocation1], 2
        %v1101 = vld [vmem:[%s1100] ss:$9 sm:$0xff]
        %1102 = vrot.lane.b32.xlu0 %v1101, 32
        %v1103 = vpop.permute.xlu0 %1102
        %vm1105 = vcmp.ge.s32.totalorder %v1083, 32
        %vm1106 = vcmp.lt.s32.totalorder %v1083, 48
        %vm1107 = vmand %vm1105, %vm1106
        %1108 = vst.msk [vmem:[#allocation3] sm:$0x1] %vm1107, %v1103
        %1109 = vst [vmem:[#allocation1] sm:$0xff] %v1067
        %s1110 = scalar_lea.vmem [#allocation1], 3
        %v1111 = vld [vmem:[%s1110] ss:$9 sm:$0xff]
        %1112 = vrot.lane.b32.xlu0 %v1111, 48
        %v1113 = vpop.permute.xlu0 %1112
        %vm1115 = vcmp.ge.s32.totalorder %v1083, 48
        %vm1116 = vcmp.lt.s32.totalorder %v1083, 64
        %vm1117 = vmand %vm1115, %vm1116
        %1118 = vst.msk [vmem:[#allocation3] sm:$0x1] %vm1117, %v1113
        %1119 = vst [vmem:[#allocation1] sm:$0xff] %v1067
        %s1120 = scalar_lea.vmem [#allocation1], 4
        %v1121 = vld [vmem:[%s1120] ss:$9 sm:$0xff]
        %1122 = vrot.lane.b32.xlu0 %v1121, 64
        %v1123 = vpop.permute.xlu0 %1122
        %vm1125 = vcmp.ge.s32.totalorder %v1083, 64
        %vm1126 = vcmp.lt.s32.totalorder %v1083, 80
        %vm1127 = vmand %vm1125, %vm1126
        %1128 = vst.msk [vmem:[#allocation3] sm:$0x1] %vm1127, %v1123
        %1129 = vst [vmem:[#allocation1] sm:$0xff] %v1067
        %s1130 = scalar_lea.vmem [#allocation1], 5
        %v1131 = vld [vmem:[%s1130] ss:$9 sm:$0xff]
        %1132 = vrot.lane.b32.xlu0 %v1131, 80
        %v1133 = vpop.permute.xlu0 %1132
        %vm1135 = vcmp.ge.s32.totalorder %v1083, 80
        %vm1136 = vcmp.lt.s32.totalorder %v1083, 96
        %vm1137 = vmand %vm1135, %vm1136
        %1138 = vst.msk [vmem:[#allocation3] sm:$0x1] %vm1137, %v1133
        %1139 = vst [vmem:[#allocation1] sm:$0xff] %v1067
        %s1140 = scalar_lea.vmem [#allocation1], 6
        %v1141 = vld [vmem:[%s1140] ss:$9 sm:$0xff]
        %1142 = vrot.lane.b32.xlu0 %v1141, 96
        %v1143 = vpop.permute.xlu0 %1142
        %vm1145 = vcmp.ge.s32.totalorder %v1083, 96
        %vm1146 = vcmp.lt.s32.totalorder %v1083, 112
        %vm1147 = vmand %vm1145, %vm1146
        %1148 = vst.msk [vmem:[#allocation3] sm:$0x1] %vm1147, %v1143
        %1149 = vst [vmem:[#allocation1] sm:$0xff] %v1067
        %s1150 = scalar_lea.vmem [#allocation1], 7
        %v1151 = vld [vmem:[%s1150] ss:$9 sm:$0xff]
        %1152 = vrot.lane.b32.xlu0 %v1151, 112
        %v1153 = vpop.permute.xlu0 %1152
        %vm1155 = vcmp.ge.s32.totalorder %v1083, 112
        %vm1156 = vcmp.lt.s32.totalorder %v1083, 128
        %vm1157 = vmand %vm1155, %vm1156
        %1158 = vst.msk [vmem:[#allocation3] sm:$0x1] %vm1157, %v1153
        %1159 = vst.msk [vmem:[#allocation3 + $0x1] sm:$0x1] %vm1086, %v1082
        %1161 = vst [vmem:[#allocation1] sm:$0xff] %v1082
        %s1162 = scalar_lea.vmem [#allocation1], 1
        %v1163 = vld [vmem:[%s1162] ss:$9 sm:$0xff]
        %1164 = vrot.lane.b32.xlu0 %v1163, 16
        %v1165 = vpop.permute.xlu0 %1164
        %1167 = vst.msk [vmem:[#allocation3 + $0x1] sm:$0x1] %vm1097, %v1165
        %1168 = vst [vmem:[#allocation1] sm:$0xff] %v1082
        %s1169 = scalar_lea.vmem [#allocation1], 2
        %v1170 = vld [vmem:[%s1169] ss:$9 sm:$0xff]
        %1171 = vrot.lane.b32.xlu0 %v1170, 32
        %v1172 = vpop.permute.xlu0 %1171
        %1174 = vst.msk [vmem:[#allocation3 + $0x1] sm:$0x1] %vm1107, %v1172
        %1175 = vst [vmem:[#allocation1] sm:$0xff] %v1082
        %s1176 = scalar_lea.vmem [#allocation1], 3
        %v1177 = vld [vmem:[%s1176] ss:$9 sm:$0xff]
        %1178 = vrot.lane.b32.xlu0 %v1177, 48
        %v1179 = vpop.permute.xlu0 %1178
        %1181 = vst.msk [vmem:[#allocation3 + $0x1] sm:$0x1] %vm1117, %v1179
        %1182 = vst [vmem:[#allocation1] sm:$0xff] %v1082
        %s1183 = scalar_lea.vmem [#allocation1], 4
        %v1184 = vld [vmem:[%s1183] ss:$9 sm:$0xff]
        %1185 = vrot.lane.b32.xlu0 %v1184, 64
        %v1186 = vpop.permute.xlu0 %1185
        %1188 = vst.msk [vmem:[#allocation3 + $0x1] sm:$0x1] %vm1127, %v1186
        %1189 = vst [vmem:[#allocation1] sm:$0xff] %v1082
        %s1190 = scalar_lea.vmem [#allocation1], 5
        %v1191 = vld [vmem:[%s1190] ss:$9 sm:$0xff]
        %1192 = vrot.lane.b32.xlu0 %v1191, 80
        %v1193 = vpop.permute.xlu0 %1192
        %1195 = vst.msk [vmem:[#allocation3 + $0x1] sm:$0x1] %vm1137, %v1193
        %1196 = vst [vmem:[#allocation1] sm:$0xff] %v1082
        %s1197 = scalar_lea.vmem [#allocation1], 6
        %v1198 = vld [vmem:[%s1197] ss:$9 sm:$0xff]
        %1199 = vrot.lane.b32.xlu0 %v1198, 96
        %v1200 = vpop.permute.xlu0 %1199
        %1202 = vst.msk [vmem:[#allocation3 + $0x1] sm:$0x1] %vm1147, %v1200
        %1203 = vst [vmem:[#allocation1] sm:$0xff] %v1082
        %s1204 = scalar_lea.vmem [#allocation1], 7
        %v1205 = vld [vmem:[%s1204] ss:$9 sm:$0xff]
        %1206 = vrot.lane.b32.xlu0 %v1205, 112
        %v1207 = vpop.permute.xlu0 %1206
        %1209 = vst.msk [vmem:[#allocation3 + $0x1] sm:$0x1] %vm1157, %v1207
        %v1210 = vld [vmem:[#allocation3] sm:$0x3]
        %v1211 = vld [vmem:[%s181] sm:$0xff]
        %v1213 = vperm.slane %v1210, 0
        %v1214 = vperm.slane %v1210, 1
        %v1215 = vrot.slane %v1214, 4
        %v1216 = vsel %vm329, %v1213, %v1215
        %v1218 = vmul.f32 %v1211, %v1216
        %1219 = vst [vmem:[%s215] sm:$0xff] %v1218
        %s1220 = sand.u32 %s98, 1
        %s1221 = scalar_lea.sflag [#allocation6], %s1220
        %s1222 = sand.u32 %s98, 1
        %s1223 = smul.addr %s1222, 8
        %s1224 = scalar_lea.vmem [#allocation11], %s1223
        // Predicated region
        $region45: #{tpu_custom_call.1} parent=31 // pred_check
          %p1225 = pneg %p108
        $region46: #{tpu_custom_call.1} parent=31 // pred_check_branch
          %1227 = sbr.rel (%p1225) target = $region48
        $region47: #{tpu_custom_call.1} parent=31 // pred_region
          %1229 = vsyncadd %s1221, 0
          %s1230 = smul.addr %s22, 2
          %s1231 = smul.addr %s1230, 4
          %s1232 = scalar_lea.hbm %s3, %s1231
          %s1234 = sshll.u32 %s1224, 4
          %s1235 = int_to_ptr.vmem [resolvable:$true] %s1234
          %s1236 = sshll.u32 %s1232, 4
          %s1237 = int_to_ptr.hbm [resolvable:$true] %s1236
          %1239 = dma.vmem_to_hbm [thread:$0]  %s1235, 128, %s1237, %s1221
        $region48: #{tpu_custom_call.1} parent=31 // pred_fallthru
          _
      $region32: #{tpu_custom_call.1} parent=5 // pred_fallthru
        _
      %p1240 = scmp.le.s32.totalorder 2, %s17
      // Predicated region
      $region49: #{tpu_custom_call.1} parent=5 // pred_check
        %p1241 = pneg %p1240
      $region50: #{tpu_custom_call.1} parent=5 // pred_check_branch
        %1243 = sbr.rel (%p1241) target = $region52
      $region51: #{tpu_custom_call.1} parent=5 // pred_region
        %s1244 = ssub.s32 %s17, 2
        // Predicated region
        $region53: #{tpu_custom_call.1} parent=51 // pred_check
          %p1245 = pneg %p114
        $region54: #{tpu_custom_call.1} parent=51 // pred_check_branch
          %1247 = sbr.rel (%p1245) target = $region56
        $region55: #{tpu_custom_call.1} parent=51 // pred_region
          %s1248 = sand.u32 %s99, 1
          %s1249 = scalar_lea.sflag [#allocation6], %s1248
          %s1250 = sand.u32 %s99, 1
          %s1251 = smul.addr %s1250, 8
          %s1252 = scalar_lea.vmem [#allocation11], %s1251
          %1254 = dma.done %s1249, 128
        $region56: #{tpu_custom_call.1} parent=51 // pred_fallthru
          _
      $region52: #{tpu_custom_call.1} parent=5 // pred_fallthru
        _
    $region6: #{tpu_custom_call.1} parent=1 // loop_footer
      %s21 = sadd.s32 1, %s17
    $region7: #{tpu_custom_call.1} parent=1 // loop_footer_branch
      %16 = sbr.rel target = $region3
    $region8: #{tpu_custom_call.1} parent=1 // loop_exit
      _
    %1255 = vsyncpa [#allocation5], 1
    %s1256 = scalar_lea.sflag [#allocation5], 1
    %1257 = vsyncpa %s1256, 1
    %1258 = vsyncpa [#allocation6], 1
    %s1259 = scalar_lea.sflag [#allocation6], 1
    %1260 = vsyncpa %s1259, 1
    %1261 = vsyncpa [#allocation7], 1
    %s1262 = scalar_lea.sflag [#allocation7], 1
    %1263 = vsyncpa %s1262, 1
    %1264 = vsyncpa [#allocation8], 1
    %s1265 = scalar_lea.sflag [#allocation8], 1
    %1266 = vsyncpa %s1265, 1

</llo_original>
